<compile_context>
chip_gen: v6e
topology: v6e:2x2x1
jax: 0.10.0
libtpu: 0.0.40
codegen_flags: <defaults>
</compile_context>

<pallas_src>
from functools import partial

import numpy as np
import jax
import jax.numpy as jnp
from jax.experimental import pallas as pl
from jax.experimental.pallas import tpu as pltpu

# ---- module constants (from WaveletConv.__init__) ----
SAMPLING_RATE = 22050          # unused in forward
KSIZE = 2048                   # self.kernel_size
STRIDE = 512                   # self.stride
N_SCALES = 128                 # self.n_scales
TIME_RES = 0.256               # time_resolution
MIN_SF = 0.01
MAX_SF = 2.0
R = KSIZE // STRIDE            # 4 shifted chunk contributions per output frame
HALO = 8                       # sublane-aligned halo block (only R-1 = 3 rows are used)
assert KSIZE % STRIDE == 0 and R - 1 <= HALO


def _gausspulse(t, fc, bw=0.5, bwr=-6.0):
    """scipy.signal.gausspulse real part (default args)."""
    ref = np.power(10.0, bwr / 20.0)
    a = -(np.pi * fc * bw) ** 2 / (4.0 * np.log(ref))
    yenv = np.exp(-a * t * t)
    return yenv * np.cos(2.0 * np.pi * fc * t)


def make_filters():
    """Deterministic GaussianWavelet filter bank, shape (N_SCALES, KSIZE)."""
    min_s = TIME_RES * MIN_SF
    max_s = TIME_RES * MAX_SF
    scales = np.logspace(np.log10(min_s), np.log10(max_s), N_SCALES)
    t = TIME_RES * np.linspace(-1.0, 1.0, KSIZE)
    filt = np.stack([_gausspulse(t, fc=1.0 / s) for s in scales], axis=0)
    return jnp.asarray(filt, dtype=jnp.float32)          # (N_SCALES, KSIZE)


def _round_up(x, m):
    return ((x + m - 1) // m) * m


# ---------------- Pallas kernel ----------------
def wavelet_kernel(main_ref, halo_ref, wcat_ref, out_ref):
    # main_ref: (1, TL, 512)    chunks [lt*TL, (lt+1)*TL)
    # halo_ref: (1, 8, 512)     chunks [(lt+1)*TL, (lt+1)*TL + 8)   (only first 3 rows used)
    # wcat_ref: (512, R*128)    column block j = filters[:, j*512:(j+1)*512].T  (VMEM resident)
    # out_ref : (1, 128, TL)    transposed (PyTorch-layout) output tile
    n_scales = out_ref.shape[1]
    tl = out_ref.shape[2]
    r = wcat_ref.shape[1] // n_scales

    # Contiguous chunk window for this tile: rows m -> chunks[lt*TL + m], m in [0, TL+8).
    window = jnp.concatenate([main_ref[0], halo_ref[0]], axis=0)          # (TL+8, 512)

    # Single MXU matmul; column block j holds the shift-j partial products.
    p = jnp.dot(window, wcat_ref[...],
                preferred_element_type=jnp.float32)                       # (TL+8, R*128)

    # out[l, n] = sum_j p[l + j, j*128 + n]
    acc = p[0:tl, 0:n_scales]
    for j in range(1, r):                                                 # unrolled (r == 4)
        acc = acc + p[j:j + tl, j * n_scales:(j + 1) * n_scales]

    # abs + fused transpose to (128, TL): lane-dense store, no wrapper transpose pass.
    out_ref[0] = jnp.abs(acc).T.astype(out_ref.dtype)


@partial(jax.jit, static_argnames=("tile_l",))
def wavelet_conv(x, filters, tile_l=256):
    """x: (B, T) float32, filters: (N_SCALES, KSIZE). Returns (B, N_SCALES, L_out)."""
    assert tile_l % 128 == 0
    B, T = x.shape
    assert T >= KSIZE
    L = (T - KSIZE) // STRIDE + 1

    # L tile size: multiple of 128 (lane-dense transposed output blocks, MXU-friendly M).
    tl = min(tile_l, _round_up(L, 128))
    n_lt = pl.cdiv(L, tl)
    l_pad = n_lt * tl
    nc_pad = l_pad + HALO            # so the last tile's halo block is fully in bounds

    # Non-overlapping 512-sample chunks (pure reshape: no 4x duplication, no gather).
    # Zero-pad the chunk axis so every main/halo block is statically in bounds; padded
    # frames compute to 0 and are sliced off below.
    chunks = x[:, :(L + R - 1) * STRIDE].reshape(B, L + R - 1, STRIDE)
    chunks = jnp.pad(chunks, ((0, 0), (0, nc_pad - (L + R - 1)), (0, 0)))

    # (512, R*128): column block j = filters[:, j*512:(j+1)*512].T  (built once, ~1 MiB).
    wcat = jnp.concatenate(
        [filters[:, j * STRIDE:(j + 1) * STRIDE].T for j in range(R)], axis=1)

    out = pl.pallas_call(
        wavelet_kernel,
        out_shape=jax.ShapeDtypeStruct((B, N_SCALES, l_pad), jnp.float32),
        grid_spec=pltpu.PrefetchScalarGridSpec(
            num_scalar_prefetch=0,
            grid=(B, n_lt),
            in_specs=[
                # main chunk tile for this (batch, L-tile)
                pl.BlockSpec((1, tl, STRIDE), lambda b, lt: (b, lt, 0)),
                # 8-chunk halo = first chunks of the next tile (same array, tiny re-read)
                pl.BlockSpec((1, HALO, STRIDE),
                             lambda b, lt: (b, (lt + 1) * (tl // HALO), 0)),
                # filters: constant index_map -> stays VMEM-resident across the grid
                pl.BlockSpec((STRIDE, R * N_SCALES), lambda b, lt: (0, 0)),
            ],
            out_specs=pl.BlockSpec((1, N_SCALES, tl), lambda b, lt: (b, 0, lt)),
        ),
        compiler_params=pltpu.CompilerParams(
            dimension_semantics=("parallel", "parallel")),
    )(chunks, chunks, wcat)

    return out[:, :, :L] if l_pad != L else out


if __name__ == "__main__":
    key = jax.random.PRNGKey(0)
    filters = make_filters()                              # (128, 2048)

    def reference(xin):
        # Same semantics as nn.Conv1d(1, 128, k=2048, stride=512, bias=False) + abs.
        ref = jax.lax.conv_general_dilated(
            xin[:, None, :], filters[:, None, :],
            window_strides=(STRIDE,), padding="VALID",
            dimension_numbers=("NCH", "OIH", "NCH"))
        return jnp.abs(ref)

    k1, k2 = jax.random.split(key)

    # Small input: B=2, L_out=8 (T = 5632). Single L tile.
    B, L_OUT = 2, 8
    T = KSIZE + STRIDE * (L_OUT - 1)                      # 5632
    x = jax.random.normal(k1, (B, T), dtype=jnp.float32)
    out = jax.block_until_ready(wavelet_conv(x, filters))
    assert out.shape == (B, N_SCALES, L_OUT), out.shape
    np.testing.assert_allclose(np.asarray(out), np.asarray(reference(x)),
                               rtol=1e-3, atol=1e-3)

    # Second check: B=1, L_out=300 -> two L tiles, exercises the cross-tile halo path.
    L2 = 300
    T2 = KSIZE + STRIDE * (L2 - 1)                        # 155136
    x2 = jax.random.normal(k2, (1, T2), dtype=jnp.float32)
    out2 = jax.block_until_ready(wavelet_conv(x2, filters))
    assert out2.shape == (1, N_SCALES, L2), out2.shape
    np.testing.assert_allclose(np.asarray(out2), np.asarray(reference(x2)),
                               rtol=1e-3, atol=1e-3)

    print("KERNEL_OK")
</pallas_src>

<mosaic_0001>
module attributes {stable_mosaic.version = 11 : i64} {
  func.func @wavelet_kernel(%arg0: i32, %arg1: i32, %arg2: memref<1x128x512xf32, #tpu.memory_space<vmem>>, %arg3: memref<1x8x512xf32, #tpu.memory_space<vmem>>, %arg4: memref<512x512xf32, #tpu.memory_space<vmem>>, %arg5: memref<1x128x128xf32, #tpu.memory_space<vmem>>) attributes {dimension_semantics = [#tpu.dimension_semantics<parallel>, #tpu.dimension_semantics<parallel>], iteration_bounds = array<i64: 2, 1>, scalar_prefetch = 0 : i64, scratch_operands = 0 : i64, tpu.core_type = #tpu.core_type<tc>, window_params = [{transform_indices = @transform_0, window_bounds = array<i64: 1, 128, 512>}, {transform_indices = @transform_1, window_bounds = array<i64: 1, 8, 512>}, {pipeline_mode = #tpu.pipeline_mode<synchronous>, transform_indices = @transform_2, window_bounds = array<i64: 512, 512>}, {transform_indices = @transform_3, window_bounds = array<i64: 1, 128, 128>}]} {
    %c0 = arith.constant 0 : index
    %c0_0 = arith.constant 0 : index
    %c0_1 = arith.constant 0 : index
    %0 = vector.load %arg2[%c0, %c0_0, %c0_1] : memref<1x128x512xf32, #tpu.memory_space<vmem>>, vector<1x128x512xf32>
    %1 = vector.shape_cast %0 : vector<1x128x512xf32> to vector<128x512xf32>
    %c0_2 = arith.constant 0 : index
    %c0_3 = arith.constant 0 : index
    %c0_4 = arith.constant 0 : index
    %2 = vector.load %arg3[%c0_2, %c0_3, %c0_4] : memref<1x8x512xf32, #tpu.memory_space<vmem>>, vector<1x8x512xf32>
    %3 = vector.shape_cast %2 : vector<1x8x512xf32> to vector<8x512xf32>
    %4 = tpu.concatenate %1, %3 in 0 : vector<128x512xf32>, vector<8x512xf32> -> vector<136x512xf32>
    %c0_5 = arith.constant 0 : index
    %c0_6 = arith.constant 0 : index
    %5 = vector.load %arg4[%c0_5, %c0_6] : memref<512x512xf32, #tpu.memory_space<vmem>>, vector<512x512xf32>
    %cst = arith.constant dense<0.000000e+00> : vector<136x512xf32>
    %6 = tpu.matmul %4, %5, %cst {dimension_numbers = #tpu.dot_dimension_numbers<[1], [0], [0], [1], [0, 0, 1, 1], [], []>} : vector<136x512xf32>, vector<512x512xf32>, vector<136x512xf32> -> vector<136x512xf32>
    %7 = vector.extract_strided_slice %6 {offsets = [0, 0], sizes = [128, 128], strides = [1, 1]} : vector<136x512xf32> to vector<128x128xf32>
    %8 = vector.extract_strided_slice %6 {offsets = [1, 128], sizes = [128, 128], strides = [1, 1]} : vector<136x512xf32> to vector<128x128xf32>
    %9 = arith.addf %7, %8 : vector<128x128xf32>
    %10 = vector.extract_strided_slice %6 {offsets = [2, 256], sizes = [128, 128], strides = [1, 1]} : vector<136x512xf32> to vector<128x128xf32>
    %11 = arith.addf %9, %10 : vector<128x128xf32>
    %12 = vector.extract_strided_slice %6 {offsets = [3, 384], sizes = [128, 128], strides = [1, 1]} : vector<136x512xf32> to vector<128x128xf32>
    %13 = arith.addf %11, %12 : vector<128x128xf32>
    %14 = math.absf %13 : vector<128x128xf32>
    %15 = tpu.transpose %14, [1, 0] : vector<128x128xf32> -> vector<128x128xf32>
    %c0_7 = arith.constant 0 : index
    %c0_8 = arith.constant 0 : index
    %c0_9 = arith.constant 0 : index
    %16 = vector.load %arg5[%c0_7, %c0_8, %c0_9] : memref<1x128x128xf32, #tpu.memory_space<vmem>>, vector<1x128x128xf32>
    %17 = vector.shape_cast %16 : vector<1x128x128xf32> to vector<128x128xf32>
    %18 = vector.shape_cast %15 : vector<128x128xf32> to vector<1x128x128xf32>
    tpu.vector_store %arg5[%c0_7, %c0_8, %c0_9], %18 {strides = array<i32>} : memref<1x128x128xf32, #tpu.memory_space<vmem>>, vector<1x128x128xf32>,
    return
  }
  func.func @transform_0(%arg0: i32, %arg1: i32) -> (i32, i32, i32) {
    %c0_i32 = arith.constant 0 : i32
    %c0_i32_0 = arith.constant 0 : i32
    return %arg0, %arg1, %c0_i32 : i32, i32, i32
  }
  func.func @transform_1(%arg0: i32, %arg1: i32) -> (i32, i32, i32) {
    %c1_i32 = arith.constant 1 : i32
    %0 = arith.addi %arg1, %c1_i32 : i32
    %c16_i32 = arith.constant 16 : i32
    %1 = arith.muli %0, %c16_i32 : i32
    %c0_i32 = arith.constant 0 : i32
    %c0_i32_0 = arith.constant 0 : i32
    return %arg0, %1, %c0_i32 : i32, i32, i32
  }
  func.func @transform_2(%arg0: i32, %arg1: i32) -> (i32, i32) {
    %c0_i32 = arith.constant 0 : i32
    %c0_i32_0 = arith.constant 0 : i32
    %c0_i32_1 = arith.constant 0 : i32
    return %c0_i32, %c0_i32_0 : i32, i32
  }
  func.func @transform_3(%arg0: i32, %arg1: i32) -> (i32, i32, i32) {
    %c0_i32 = arith.constant 0 : i32
    %c0_i32_0 = arith.constant 0 : i32
    return %arg0, %c0_i32, %arg1 : i32, i32, i32
  }
}

</mosaic_0001>

<llo_original>
// kernel: wavelet_conv.1
$region0: #{wavelet_conv.1}
  #allocation0 [shape = 'u32[]', space=smem, size = 0x4, offset = 0x4, fixed_abs, tag = 'smem constant byte address 0x4 - core index']
  #allocation1 [shape = 'u32[144,128]{1,0:T(1,128)}', space=vmem, size = 0x12000, scoped, tag = 'internal scratch']
  %s0 = inlined_call_operand.vmem [shape: f32[2,136,512], index: 0, kind: input, shape index: {}, may-alias: {0,1}]
  %s1 = inlined_call_operand.vmem [shape: f32[2,136,512], index: 1, kind: input, shape index: {}, may-alias: {0,1}]
  %s2 = inlined_call_operand.vmem [shape: f32[512,512], index: 2, kind: input, shape index: {}]
  %s3 = inlined_call_operand.vmem [shape: f32[2,128,128], index: 3, kind: output, shape index: {}]
  %s4 = sld [smem:[#allocation0]]
  $region45: #{wavelet_conv.1} parent=0
    _
  %s6 = ssub.s32 1, %s4
  %s7 = scalar_select 0, %s6, %s4
  loop: start=0, step=1, limit=4
  $region2: #{wavelet_conv.1} parent=0 // loop_pre_header
    _
  $region3: #{wavelet_conv.1} parent=0 // loop_header
    %s9 = sphi 0, %s13
    %p10 = scmp.ge.s32.totalorder %s9, 4
    %s16 = sphi 0, %s28
    %s17 = sphi 0, %s24
    %s18 = sphi 0, %s16
    %s19 = sphi 0, %s17
    %s20 = sphi 0, %s18
    %s21 = sphi 0, %s19
    %s33 = sphi 0, %s35
    %s36 = sphi 0, %s33
    %s37 = sphi 0, %s36
    %s53 = sphi 0, %s37
    %s65 = sphi 0, %s67
    %s68 = sphi 0, %s65
    %s69 = sphi 0, %s68
    %s85 = sphi 0, %s69
    %s89 = sphi 0, %s89
    %s91 = sphi 0, %s89
    %s92 = sphi 0, %s91
    %s106 = sphi 0, %s92
    %s114 = sphi 0, %s116
    %s117 = sphi 0, %s114
    %s118 = sphi 0, %s117
    %s134 = sphi 0, %s118
  $region4: #{wavelet_conv.1} parent=0 // loop_header_branch
    %12 = sbr.rel (%p10) target = $region8
  $region5: #{wavelet_conv.1} parent=0 // loop_body
    %s14 = ssub.s32 %s9, 1
    %s15 = ssub.s32 %s9, 2
    %s22 = sadd.s32 1, %s17
    %p23 = scmp.ge.s32.totalorder %s22, 1
    %s24 = scalar_select %p23, 0, %s22
    %s25 = sadd.s32 1, %s16
    %s26 = scalar_select %p23, %s25, %s16
    %p27 = scmp.ge.s32.totalorder %s26, 2
    %s28 = scalar_select %p27, 0, %s26
    %s29 = ssub.s32 %s16, %s28
    %s30 = ssub.s32 %s17, %s24
    %s31 = sor.u32 %s29, %s30
    %p32 = scmp.eq.s32.totalorder %s31, 0
    %s34 = sadd.s32 %s33, 1
    %s35 = scalar_select %p32, %s33, %s34
    %p38 = pneg %p32
    %p39 = scmp.eq.s32.totalorder %s9, 1
    %p40 = por %p38, %p39
    %p41 = scmp.ne.s32.totalorder %s33, %s36
    %p42 = scmp.eq.s32.totalorder %s9, 0
    %p43 = por %p41, %p42
    %p44 = scmp.ne.s32.totalorder %s33, %s36
    %p45 = scmp.eq.s32.totalorder %s14, 1
    %p46 = por %p44, %p45
    %p47 = scmp.ne.s32.totalorder %s36, %s37
    %p48 = scmp.eq.s32.totalorder %s14, 0
    %p49 = por %p47, %p48
    %p50 = scmp.ne.s32.totalorder %s36, %s37
    %p51 = scmp.eq.s32.totalorder %s15, 1
    %p52 = por %p50, %p51
    %p54 = scmp.ne.s32.totalorder %s37, %s53
    %p55 = scmp.eq.s32.totalorder %s15, 0
    %p56 = por %p54, %p55
    %s57 = sadd.s32 %s17, 1
    %s58 = smul.u32 %s57, 16
    %s59 = sadd.s32 %s24, 1
    %s60 = smul.u32 %s59, 16
    %s61 = ssub.s32 %s16, %s28
    %s62 = ssub.s32 %s58, %s60
    %s63 = sor.u32 %s61, %s62
    %p64 = scmp.eq.s32.totalorder %s63, 0
    %s66 = sadd.s32 %s65, 1
    %s67 = scalar_select %p64, %s65, %s66
    %p70 = pneg %p64
    %p71 = scmp.eq.s32.totalorder %s9, 1
    %p72 = por %p70, %p71
    %p73 = scmp.ne.s32.totalorder %s65, %s68
    %p74 = scmp.eq.s32.totalorder %s9, 0
    %p75 = por %p73, %p74
    %p76 = scmp.ne.s32.totalorder %s65, %s68
    %p77 = scmp.eq.s32.totalorder %s14, 1
    %p78 = por %p76, %p77
    %p79 = scmp.ne.s32.totalorder %s68, %s69
    %p80 = scmp.eq.s32.totalorder %s14, 0
    %p81 = por %p79, %p80
    %p82 = scmp.ne.s32.totalorder %s68, %s69
    %p83 = scmp.eq.s32.totalorder %s15, 1
    %p84 = por %p82, %p83
    %p86 = scmp.ne.s32.totalorder %s69, %s85
    %p87 = scmp.eq.s32.totalorder %s15, 0
    %p88 = por %p86, %p87
    %s90 = sadd.s32 %s89, 1
    %p93 = scmp.eq.s32.totalorder %s9, 1
    %p94 = scmp.ne.s32.totalorder %s89, %s91
    %p95 = scmp.eq.s32.totalorder %s9, 0
    %p96 = por %p94, %p95
    %p97 = scmp.ne.s32.totalorder %s89, %s91
    %p98 = scmp.eq.s32.totalorder %s14, 1
    %p99 = por %p97, %p98
    %p100 = scmp.ne.s32.totalorder %s91, %s92
    %p101 = scmp.eq.s32.totalorder %s14, 0
    %p102 = por %p100, %p101
    %p103 = scmp.ne.s32.totalorder %s91, %s92
    %p104 = scmp.eq.s32.totalorder %s15, 1
    %p105 = por %p103, %p104
    %p107 = scmp.ne.s32.totalorder %s92, %s106
    %p108 = scmp.eq.s32.totalorder %s15, 0
    %p109 = por %p107, %p108
    %s110 = ssub.s32 %s16, %s28
    %s111 = ssub.s32 %s17, %s24
    %s112 = sor.u32 %s110, %s111
    %p113 = scmp.eq.s32.totalorder %s112, 0
    %s115 = sadd.s32 %s114, 1
    %s116 = scalar_select %p113, %s114, %s115
    %p119 = pneg %p113
    %p120 = scmp.eq.s32.totalorder %s9, 1
    %p121 = por %p119, %p120
    %p122 = scmp.ne.s32.totalorder %s114, %s117
    %p123 = scmp.eq.s32.totalorder %s9, 0
    %p124 = por %p122, %p123
    %p125 = scmp.ne.s32.totalorder %s114, %s117
    %p126 = scmp.eq.s32.totalorder %s14, 1
    %p127 = por %p125, %p126
    %p128 = scmp.ne.s32.totalorder %s117, %s118
    %p129 = scmp.eq.s32.totalorder %s14, 0
    %p130 = por %p128, %p129
    %p131 = scmp.ne.s32.totalorder %s117, %s118
    %p132 = scmp.eq.s32.totalorder %s15, 1
    %p133 = por %p131, %p132
    %p135 = scmp.ne.s32.totalorder %s118, %s134
    %p136 = scmp.eq.s32.totalorder %s15, 0
    %p137 = por %p135, %p136
    %p138 = scmp.le.s32.totalorder 1, %s9
    %p139 = scmp.lt.s32.totalorder %s9, 3
    %p140 = pnand %p138, %p139
    %p141 = pneg %p140
    // Predicated region
    $region9: #{wavelet_conv.1} parent=5 // pred_check
      _
    $region10: #{wavelet_conv.1} parent=5 // pred_check_branch
      %143 = sbr.rel (%p140) target = $region12
    $region11: #{wavelet_conv.1} parent=5 // pred_region
      %s144 = ssub.s32 %s9, 1
      // Predicated region
      $region13: #{wavelet_conv.1} parent=11 // pred_check
        %p145 = pneg %p102
      $region14: #{wavelet_conv.1} parent=11 // pred_check_branch
        %147 = sbr.rel (%p145) target = $region16
      $region15: #{wavelet_conv.1} parent=11 // pred_region
        _
      $region16: #{wavelet_conv.1} parent=11 // pred_fallthru
        _
    $region12: #{wavelet_conv.1} parent=5 // pred_fallthru
      _
    %p148 = scmp.lt.s32.totalorder %s9, 2
    // Predicated region
    $region17: #{wavelet_conv.1} parent=5 // pred_check
      %p149 = pneg %p148
    $region18: #{wavelet_conv.1} parent=5 // pred_check_branch
      %151 = sbr.rel (%p149) target = $region20
    $region19: #{wavelet_conv.1} parent=5 // pred_region
      // Predicated region
      $region21: #{wavelet_conv.1} parent=19 // pred_check
        %p152 = pneg %p43
      $region22: #{wavelet_conv.1} parent=19 // pred_check_branch
        %154 = sbr.rel (%p152) target = $region24
      $region23: #{wavelet_conv.1} parent=19 // pred_region
        %s155 = smul.u32 16, %s17
        %s156 = ssub.s32 17, %s155
        %p157 = scmp.lt.s32.totalorder %s156, 16
        %s158 = scalar_select %p157, %s156, 16
        %s159 = smul.u32 128, %s158
        %s160 = smul.u32 %s159, 4
        %p161 = scmp.lt.s32.totalorder %s16, 1
        %s162 = scalar_select %p161, %s16, 1
        %p163 = scmp.lt.s32.totalorder %s155, 16
        %s164 = scalar_select %p163, %s155, 16
        %s165 = smul.addr %s164, 4
        %s166 = smul.addr %s162, 68
        %s167 = sadd.s32 %s165, %s166
        %s168 = smul.addr %s167, 8
        %s169 = scalar_lea.vmem %s0, %s168
        %s170 = smul.u32 16, %s17
        %s171 = ssub.s32 17, %s170
        %p172 = scmp.lt.s32.totalorder %s171, 16
        %s173 = scalar_select %p172, %s171, 16
        %s174 = smul.u32 128, %s173
        %s175 = smul.u32 %s174, 4
      $region24: #{wavelet_conv.1} parent=19 // pred_fallthru
        _
      // Predicated region
      $region25: #{wavelet_conv.1} parent=19 // pred_check
        %p176 = pneg %p75
      $region26: #{wavelet_conv.1} parent=19 // pred_check_branch
        %178 = sbr.rel (%p176) target = $region28
      $region27: #{wavelet_conv.1} parent=19 // pred_region
        %s179 = sadd.s32 %s17, 1
        %s180 = smul.u32 %s179, 16
        %p181 = scmp.lt.s32.totalorder %s16, 1
        %s182 = scalar_select %p181, %s16, 1
        %p183 = scmp.lt.s32.totalorder %s180, 16
        %s184 = scalar_select %p183, %s180, 16
        %s185 = smul.addr %s184, 4
        %s186 = smul.addr %s182, 68
        %s187 = sadd.s32 %s185, %s186
        %s188 = smul.addr %s187, 8
        %s189 = scalar_lea.vmem %s1, %s188
        %s190 = sadd.s32 %s17, 1
        %s191 = smul.u32 %s190, 16
      $region28: #{wavelet_conv.1} parent=19 // pred_fallthru
        _
    $region20: #{wavelet_conv.1} parent=5 // pred_fallthru
      _
    %p192 = scmp.le.s32.totalorder 1, %s9
    %p193 = scmp.lt.s32.totalorder %s9, 3
    %p194 = pnand %p192, %p193
    %p195 = pneg %p194
    // Predicated region
    $region29: #{wavelet_conv.1} parent=5 // pred_check
      _
    $region30: #{wavelet_conv.1} parent=5 // pred_check_branch
      %197 = sbr.rel (%p194) target = $region32
    $region31: #{wavelet_conv.1} parent=5 // pred_region
      %s198 = ssub.s32 %s9, 1
      %s199 = smul.u32 16, %s19
      %s200 = ssub.s32 17, %s199
      %p201 = scmp.lt.s32.totalorder %s200, 16
      %s202 = scalar_select %p201, %s200, 16
      %s203 = smul.u32 128, %s202
      %s204 = smul.u32 %s203, 4
      %p205 = scmp.lt.s32.totalorder %s18, 1
      %s206 = scalar_select %p205, %s18, 1
      %p207 = scmp.lt.s32.totalorder %s199, 16
      %s208 = scalar_select %p207, %s199, 16
      %s209 = smul.addr %s208, 4
      %s210 = smul.addr %s206, 68
      %s211 = sadd.s32 %s209, %s210
      %s212 = smul.addr %s211, 8
      %s213 = scalar_lea.vmem %s0, %s212
      %p214 = pneg %p49
      %p215 = pneg %p46
      %s216 = sadd.s32 %s19, 1
      %s217 = smul.u32 %s216, 16
      %p218 = scmp.lt.s32.totalorder %s18, 1
      %s219 = scalar_select %p218, %s18, 1
      %p220 = scmp.lt.s32.totalorder %s217, 16
      %s221 = scalar_select %p220, %s217, 16
      %s222 = smul.addr %s221, 4
      %s223 = smul.addr %s219, 68
      %s224 = sadd.s32 %s222, %s223
      %s225 = smul.addr %s224, 8
      %s226 = scalar_lea.vmem %s1, %s225
      %p227 = pneg %p81
      %p228 = pneg %p78
      %p229 = pneg %p102
      %p230 = pneg %p99
      %p231 = pneg %p130
      %p232 = pneg %p127
      %p233 = scmp.lt.s32.totalorder %s18, 1
      %s234 = scalar_select %p233, %s18, 1
      %p235 = scmp.lt.s32.totalorder %s19, 0
      %s236 = scalar_select %p235, %s19, 0
      %s237 = smul.addr %s234, 16
      %s238 = sadd.s32 %s236, %s237
      %s239 = smul.addr %s238, 8
      %s240 = scalar_lea.vmem %s3, %s239
      %s241 = smul.u32 16, %s19
      %s242 = ssub.s32 17, %s241
      %p243 = scmp.lt.s32.totalorder %s242, 16
      %s244 = scalar_select %p243, %s242, 16
      %s245 = smul.u32 128, %s244
      %s246 = smul.u32 %s245, 4
      %p247 = scmp.lt.s32.totalorder %s18, 1
      %s248 = scalar_select %p247, %s18, 1
      %p249 = scmp.lt.s32.totalorder %s241, 16
      %s250 = scalar_select %p249, %s241, 16
      %s251 = smul.addr %s250, 4
      %s252 = smul.addr %s248, 68
      %s253 = sadd.s32 %s251, %s252
      %s254 = smul.addr %s253, 8
      %s255 = scalar_lea.vmem %s0, %s254
      %s256 = smul.u32 16, %s19
      %s257 = ssub.s32 17, %s256
      %p258 = scmp.lt.s32.totalorder %s257, 16
      %s259 = scalar_select %p258, %s257, 16
      %s260 = smul.u32 128, %s259
      %s261 = smul.u32 %s260, 4
      %s262 = sadd.s32 %s19, 1
      %s263 = smul.u32 %s262, 16
      %p264 = scmp.lt.s32.totalorder %s18, 1
      %s265 = scalar_select %p264, %s18, 1
      %p266 = scmp.lt.s32.totalorder %s263, 16
      %s267 = scalar_select %p266, %s263, 16
      %s268 = smul.addr %s267, 4
      %s269 = smul.addr %s265, 68
      %s270 = sadd.s32 %s268, %s269
      %s271 = smul.addr %s270, 8
      %s272 = scalar_lea.vmem %s1, %s271
      %s273 = sadd.s32 %s19, 1
      %s274 = smul.u32 %s273, 16
      %p275 = scmp.lt.s32.totalorder %s18, 1
      %s276 = scalar_select %p275, %s18, 1
      %p277 = scmp.lt.s32.totalorder %s19, 0
      %s278 = scalar_select %p277, %s19, 0
      %s279 = smul.addr %s276, 16
      %s280 = sadd.s32 %s278, %s279
      %s281 = smul.addr %s280, 8
      %s282 = scalar_lea.vmem %s3, %s281
      %v283 = vld [vmem:[%s255] sm:$0xff]
      %v284 = vld [vmem:[%s255 + $0x8] sm:$0xff]
      %v285 = vld [vmem:[%s255 + $0x10] sm:$0xff]
      %v286 = vld [vmem:[%s255 + $0x18] sm:$0xff]
      %v287 = vld [vmem:[%s255 + $0x20] sm:$0xff]
      %v288 = vld [vmem:[%s255 + $0x28] sm:$0xff]
      %v289 = vld [vmem:[%s255 + $0x30] sm:$0xff]
      %v290 = vld [vmem:[%s255 + $0x38] sm:$0xff]
      %v291 = vld [vmem:[%s255 + $0x40] sm:$0xff]
      %v292 = vld [vmem:[%s255 + $0x48] sm:$0xff]
      %v293 = vld [vmem:[%s255 + $0x50] sm:$0xff]
      %v294 = vld [vmem:[%s255 + $0x58] sm:$0xff]
      %v295 = vld [vmem:[%s255 + $0x60] sm:$0xff]
      %v296 = vld [vmem:[%s255 + $0x68] sm:$0xff]
      %v297 = vld [vmem:[%s255 + $0x70] sm:$0xff]
      %v298 = vld [vmem:[%s255 + $0x78] sm:$0xff]
      %v299 = vld [vmem:[%s255 + $0x80] sm:$0xff]
      %v300 = vld [vmem:[%s255 + $0x88] sm:$0xff]
      %v301 = vld [vmem:[%s255 + $0x90] sm:$0xff]
      %v302 = vld [vmem:[%s255 + $0x98] sm:$0xff]
      %v303 = vld [vmem:[%s255 + $0xa0] sm:$0xff]
      %v304 = vld [vmem:[%s255 + $0xa8] sm:$0xff]
      %v305 = vld [vmem:[%s255 + $0xb0] sm:$0xff]
      %v306 = vld [vmem:[%s255 + $0xb8] sm:$0xff]
      %v307 = vld [vmem:[%s255 + $0xc0] sm:$0xff]
      %v308 = vld [vmem:[%s255 + $0xc8] sm:$0xff]
      %v309 = vld [vmem:[%s255 + $0xd0] sm:$0xff]
      %v310 = vld [vmem:[%s255 + $0xd8] sm:$0xff]
      %v311 = vld [vmem:[%s255 + $0xe0] sm:$0xff]
      %v312 = vld [vmem:[%s255 + $0xe8] sm:$0xff]
      %v313 = vld [vmem:[%s255 + $0xf0] sm:$0xff]
      %v314 = vld [vmem:[%s255 + $0xf8] sm:$0xff]
      %v315 = vld [vmem:[%s255 + $0x100] sm:$0xff]
      %v316 = vld [vmem:[%s255 + $0x108] sm:$0xff]
      %v317 = vld [vmem:[%s255 + $0x110] sm:$0xff]
      %v318 = vld [vmem:[%s255 + $0x118] sm:$0xff]
      %v319 = vld [vmem:[%s255 + $0x120] sm:$0xff]
      %v320 = vld [vmem:[%s255 + $0x128] sm:$0xff]
      %v321 = vld [vmem:[%s255 + $0x130] sm:$0xff]
      %v322 = vld [vmem:[%s255 + $0x138] sm:$0xff]
      %v323 = vld [vmem:[%s255 + $0x140] sm:$0xff]
      %v324 = vld [vmem:[%s255 + $0x148] sm:$0xff]
      %v325 = vld [vmem:[%s255 + $0x150] sm:$0xff]
      %v326 = vld [vmem:[%s255 + $0x158] sm:$0xff]
      %v327 = vld [vmem:[%s255 + $0x160] sm:$0xff]
      %v328 = vld [vmem:[%s255 + $0x168] sm:$0xff]
      %v329 = vld [vmem:[%s255 + $0x170] sm:$0xff]
      %v330 = vld [vmem:[%s255 + $0x178] sm:$0xff]
      %v331 = vld [vmem:[%s255 + $0x180] sm:$0xff]
      %v332 = vld [vmem:[%s255 + $0x188] sm:$0xff]
      %v333 = vld [vmem:[%s255 + $0x190] sm:$0xff]
      %v334 = vld [vmem:[%s255 + $0x198] sm:$0xff]
      %v335 = vld [vmem:[%s255 + $0x1a0] sm:$0xff]
      %v336 = vld [vmem:[%s255 + $0x1a8] sm:$0xff]
      %v337 = vld [vmem:[%s255 + $0x1b0] sm:$0xff]
      %v338 = vld [vmem:[%s255 + $0x1b8] sm:$0xff]
      %v339 = vld [vmem:[%s255 + $0x1c0] sm:$0xff]
      %v340 = vld [vmem:[%s255 + $0x1c8] sm:$0xff]
      %v341 = vld [vmem:[%s255 + $0x1d0] sm:$0xff]
      %v342 = vld [vmem:[%s255 + $0x1d8] sm:$0xff]
      %v343 = vld [vmem:[%s255 + $0x1e0] sm:$0xff]
      %v344 = vld [vmem:[%s255 + $0x1e8] sm:$0xff]
      %v345 = vld [vmem:[%s255 + $0x1f0] sm:$0xff]
      %v346 = vld [vmem:[%s255 + $0x1f8] sm:$0xff]
      %v347 = vld [vmem:[%s272] sm:$0xff]
      %v348 = vld [vmem:[%s272 + $0x8] sm:$0xff]
      %v349 = vld [vmem:[%s272 + $0x10] sm:$0xff]
      %v350 = vld [vmem:[%s272 + $0x18] sm:$0xff]
      %v351 = vld [vmem:[%s2] sm:$0xff]
      %v352 = vld [vmem:[%s2 + $0x8] sm:$0xff]
      %v353 = vld [vmem:[%s2 + $0x10] sm:$0xff]
      %v354 = vld [vmem:[%s2 + $0x18] sm:$0xff]
      %v355 = vld [vmem:[%s2 + $0x20] sm:$0xff]
      %v356 = vld [vmem:[%s2 + $0x28] sm:$0xff]
      %v357 = vld [vmem:[%s2 + $0x30] sm:$0xff]
      %v358 = vld [vmem:[%s2 + $0x38] sm:$0xff]
      %v359 = vld [vmem:[%s2 + $0x40] sm:$0xff]
      %v360 = vld [vmem:[%s2 + $0x48] sm:$0xff]
      %v361 = vld [vmem:[%s2 + $0x50] sm:$0xff]
      %v362 = vld [vmem:[%s2 + $0x58] sm:$0xff]
      %v363 = vld [vmem:[%s2 + $0x60] sm:$0xff]
      %v364 = vld [vmem:[%s2 + $0x68] sm:$0xff]
      %v365 = vld [vmem:[%s2 + $0x70] sm:$0xff]
      %v366 = vld [vmem:[%s2 + $0x78] sm:$0xff]
      %v367 = vld [vmem:[%s2 + $0x80] sm:$0xff]
      %v368 = vld [vmem:[%s2 + $0x88] sm:$0xff]
      %v369 = vld [vmem:[%s2 + $0x90] sm:$0xff]
      %v370 = vld [vmem:[%s2 + $0x98] sm:$0xff]
      %v371 = vld [vmem:[%s2 + $0xa0] sm:$0xff]
      %v372 = vld [vmem:[%s2 + $0xa8] sm:$0xff]
      %v373 = vld [vmem:[%s2 + $0xb0] sm:$0xff]
      %v374 = vld [vmem:[%s2 + $0xb8] sm:$0xff]
      %v375 = vld [vmem:[%s2 + $0xc0] sm:$0xff]
      %v376 = vld [vmem:[%s2 + $0xc8] sm:$0xff]
      %v377 = vld [vmem:[%s2 + $0xd0] sm:$0xff]
      %v378 = vld [vmem:[%s2 + $0xd8] sm:$0xff]
      %v379 = vld [vmem:[%s2 + $0xe0] sm:$0xff]
      %v380 = vld [vmem:[%s2 + $0xe8] sm:$0xff]
      %v381 = vld [vmem:[%s2 + $0xf0] sm:$0xff]
      %v382 = vld [vmem:[%s2 + $0xf8] sm:$0xff]
      %v383 = vld [vmem:[%s2 + $0x100] sm:$0xff]
      %v384 = vld [vmem:[%s2 + $0x108] sm:$0xff]
      %v385 = vld [vmem:[%s2 + $0x110] sm:$0xff]
      %v386 = vld [vmem:[%s2 + $0x118] sm:$0xff]
      %v387 = vld [vmem:[%s2 + $0x120] sm:$0xff]
      %v388 = vld [vmem:[%s2 + $0x128] sm:$0xff]
      %v389 = vld [vmem:[%s2 + $0x130] sm:$0xff]
      %v390 = vld [vmem:[%s2 + $0x138] sm:$0xff]
      %v391 = vld [vmem:[%s2 + $0x140] sm:$0xff]
      %v392 = vld [vmem:[%s2 + $0x148] sm:$0xff]
      %v393 = vld [vmem:[%s2 + $0x150] sm:$0xff]
      %v394 = vld [vmem:[%s2 + $0x158] sm:$0xff]
      %v395 = vld [vmem:[%s2 + $0x160] sm:$0xff]
      %v396 = vld [vmem:[%s2 + $0x168] sm:$0xff]
      %v397 = vld [vmem:[%s2 + $0x170] sm:$0xff]
      %v398 = vld [vmem:[%s2 + $0x178] sm:$0xff]
      %v399 = vld [vmem:[%s2 + $0x180] sm:$0xff]
      %v400 = vld [vmem:[%s2 + $0x188] sm:$0xff]
      %v401 = vld [vmem:[%s2 + $0x190] sm:$0xff]
      %v402 = vld [vmem:[%s2 + $0x198] sm:$0xff]
      %v403 = vld [vmem:[%s2 + $0x1a0] sm:$0xff]
      %v404 = vld [vmem:[%s2 + $0x1a8] sm:$0xff]
      %v405 = vld [vmem:[%s2 + $0x1b0] sm:$0xff]
      %v406 = vld [vmem:[%s2 + $0x1b8] sm:$0xff]
      %v407 = vld [vmem:[%s2 + $0x1c0] sm:$0xff]
      %v408 = vld [vmem:[%s2 + $0x1c8] sm:$0xff]
      %v409 = vld [vmem:[%s2 + $0x1d0] sm:$0xff]
      %v410 = vld [vmem:[%s2 + $0x1d8] sm:$0xff]
      %v411 = vld [vmem:[%s2 + $0x1e0] sm:$0xff]
      %v412 = vld [vmem:[%s2 + $0x1e8] sm:$0xff]
      %v413 = vld [vmem:[%s2 + $0x1f0] sm:$0xff]
      %v414 = vld [vmem:[%s2 + $0x1f8] sm:$0xff]
      %v415 = vld [vmem:[%s2 + $0x200] sm:$0xff]
      %v416 = vld [vmem:[%s2 + $0x208] sm:$0xff]
      %v417 = vld [vmem:[%s2 + $0x210] sm:$0xff]
      %v418 = vld [vmem:[%s2 + $0x218] sm:$0xff]
      %v419 = vld [vmem:[%s2 + $0x220] sm:$0xff]
      %v420 = vld [vmem:[%s2 + $0x228] sm:$0xff]
      %v421 = vld [vmem:[%s2 + $0x230] sm:$0xff]
      %v422 = vld [vmem:[%s2 + $0x238] sm:$0xff]
      %v423 = vld [vmem:[%s2 + $0x240] sm:$0xff]
      %v424 = vld [vmem:[%s2 + $0x248] sm:$0xff]
      %v425 = vld [vmem:[%s2 + $0x250] sm:$0xff]
      %v426 = vld [vmem:[%s2 + $0x258] sm:$0xff]
      %v427 = vld [vmem:[%s2 + $0x260] sm:$0xff]
      %v428 = vld [vmem:[%s2 + $0x268] sm:$0xff]
      %v429 = vld [vmem:[%s2 + $0x270] sm:$0xff]
      %v430 = vld [vmem:[%s2 + $0x278] sm:$0xff]
      %v431 = vld [vmem:[%s2 + $0x280] sm:$0xff]
      %v432 = vld [vmem:[%s2 + $0x288] sm:$0xff]
      %v433 = vld [vmem:[%s2 + $0x290] sm:$0xff]
      %v434 = vld [vmem:[%s2 + $0x298] sm:$0xff]
      %v435 = vld [vmem:[%s2 + $0x2a0] sm:$0xff]
      %v436 = vld [vmem:[%s2 + $0x2a8] sm:$0xff]
      %v437 = vld [vmem:[%s2 + $0x2b0] sm:$0xff]
      %v438 = vld [vmem:[%s2 + $0x2b8] sm:$0xff]
      %v439 = vld [vmem:[%s2 + $0x2c0] sm:$0xff]
      %v440 = vld [vmem:[%s2 + $0x2c8] sm:$0xff]
      %v441 = vld [vmem:[%s2 + $0x2d0] sm:$0xff]
      %v442 = vld [vmem:[%s2 + $0x2d8] sm:$0xff]
      %v443 = vld [vmem:[%s2 + $0x2e0] sm:$0xff]
      %v444 = vld [vmem:[%s2 + $0x2e8] sm:$0xff]
      %v445 = vld [vmem:[%s2 + $0x2f0] sm:$0xff]
      %v446 = vld [vmem:[%s2 + $0x2f8] sm:$0xff]
      %v447 = vld [vmem:[%s2 + $0x300] sm:$0xff]
      %v448 = vld [vmem:[%s2 + $0x308] sm:$0xff]
      %v449 = vld [vmem:[%s2 + $0x310] sm:$0xff]
      %v450 = vld [vmem:[%s2 + $0x318] sm:$0xff]
      %v451 = vld [vmem:[%s2 + $0x320] sm:$0xff]
      %v452 = vld [vmem:[%s2 + $0x328] sm:$0xff]
      %v453 = vld [vmem:[%s2 + $0x330] sm:$0xff]
      %v454 = vld [vmem:[%s2 + $0x338] sm:$0xff]
      %v455 = vld [vmem:[%s2 + $0x340] sm:$0xff]
      %v456 = vld [vmem:[%s2 + $0x348] sm:$0xff]
      %v457 = vld [vmem:[%s2 + $0x350] sm:$0xff]
      %v458 = vld [vmem:[%s2 + $0x358] sm:$0xff]
      %v459 = vld [vmem:[%s2 + $0x360] sm:$0xff]
      %v460 = vld [vmem:[%s2 + $0x368] sm:$0xff]
      %v461 = vld [vmem:[%s2 + $0x370] sm:$0xff]
      %v462 = vld [vmem:[%s2 + $0x378] sm:$0xff]
      %v463 = vld [vmem:[%s2 + $0x380] sm:$0xff]
      %v464 = vld [vmem:[%s2 + $0x388] sm:$0xff]
      %v465 = vld [vmem:[%s2 + $0x390] sm:$0xff]
      %v466 = vld [vmem:[%s2 + $0x398] sm:$0xff]
      %v467 = vld [vmem:[%s2 + $0x3a0] sm:$0xff]
      %v468 = vld [vmem:[%s2 + $0x3a8] sm:$0xff]
      %v469 = vld [vmem:[%s2 + $0x3b0] sm:$0xff]
      %v470 = vld [vmem:[%s2 + $0x3b8] sm:$0xff]
      %v471 = vld [vmem:[%s2 + $0x3c0] sm:$0xff]
      %v472 = vld [vmem:[%s2 + $0x3c8] sm:$0xff]
      %v473 = vld [vmem:[%s2 + $0x3d0] sm:$0xff]
      %v474 = vld [vmem:[%s2 + $0x3d8] sm:$0xff]
      %v475 = vld [vmem:[%s2 + $0x3e0] sm:$0xff]
      %v476 = vld [vmem:[%s2 + $0x3e8] sm:$0xff]
      %v477 = vld [vmem:[%s2 + $0x3f0] sm:$0xff]
      %v478 = vld [vmem:[%s2 + $0x3f8] sm:$0xff]
      %v479 = vld [vmem:[%s2 + $0x400] sm:$0xff]
      %v480 = vld [vmem:[%s2 + $0x408] sm:$0xff]
      %v481 = vld [vmem:[%s2 + $0x410] sm:$0xff]
      %v482 = vld [vmem:[%s2 + $0x418] sm:$0xff]
      %v483 = vld [vmem:[%s2 + $0x420] sm:$0xff]
      %v484 = vld [vmem:[%s2 + $0x428] sm:$0xff]
      %v485 = vld [vmem:[%s2 + $0x430] sm:$0xff]
      %v486 = vld [vmem:[%s2 + $0x438] sm:$0xff]
      %v487 = vld [vmem:[%s2 + $0x440] sm:$0xff]
      %v488 = vld [vmem:[%s2 + $0x448] sm:$0xff]
      %v489 = vld [vmem:[%s2 + $0x450] sm:$0xff]
      %v490 = vld [vmem:[%s2 + $0x458] sm:$0xff]
      %v491 = vld [vmem:[%s2 + $0x460] sm:$0xff]
      %v492 = vld [vmem:[%s2 + $0x468] sm:$0xff]
      %v493 = vld [vmem:[%s2 + $0x470] sm:$0xff]
      %v494 = vld [vmem:[%s2 + $0x478] sm:$0xff]
      %v495 = vld [vmem:[%s2 + $0x480] sm:$0xff]
      %v496 = vld [vmem:[%s2 + $0x488] sm:$0xff]
      %v497 = vld [vmem:[%s2 + $0x490] sm:$0xff]
      %v498 = vld [vmem:[%s2 + $0x498] sm:$0xff]
      %v499 = vld [vmem:[%s2 + $0x4a0] sm:$0xff]
      %v500 = vld [vmem:[%s2 + $0x4a8] sm:$0xff]
      %v501 = vld [vmem:[%s2 + $0x4b0] sm:$0xff]
      %v502 = vld [vmem:[%s2 + $0x4b8] sm:$0xff]
      %v503 = vld [vmem:[%s2 + $0x4c0] sm:$0xff]
      %v504 = vld [vmem:[%s2 + $0x4c8] sm:$0xff]
      %v505 = vld [vmem:[%s2 + $0x4d0] sm:$0xff]
      %v506 = vld [vmem:[%s2 + $0x4d8] sm:$0xff]
      %v507 = vld [vmem:[%s2 + $0x4e0] sm:$0xff]
      %v508 = vld [vmem:[%s2 + $0x4e8] sm:$0xff]
      %v509 = vld [vmem:[%s2 + $0x4f0] sm:$0xff]
      %v510 = vld [vmem:[%s2 + $0x4f8] sm:$0xff]
      %v511 = vld [vmem:[%s2 + $0x500] sm:$0xff]
      %v512 = vld [vmem:[%s2 + $0x508] sm:$0xff]
      %v513 = vld [vmem:[%s2 + $0x510] sm:$0xff]
      %v514 = vld [vmem:[%s2 + $0x518] sm:$0xff]
      %v515 = vld [vmem:[%s2 + $0x520] sm:$0xff]
      %v516 = vld [vmem:[%s2 + $0x528] sm:$0xff]
      %v517 = vld [vmem:[%s2 + $0x530] sm:$0xff]
      %v518 = vld [vmem:[%s2 + $0x538] sm:$0xff]
      %v519 = vld [vmem:[%s2 + $0x540] sm:$0xff]
      %v520 = vld [vmem:[%s2 + $0x548] sm:$0xff]
      %v521 = vld [vmem:[%s2 + $0x550] sm:$0xff]
      %v522 = vld [vmem:[%s2 + $0x558] sm:$0xff]
      %v523 = vld [vmem:[%s2 + $0x560] sm:$0xff]
      %v524 = vld [vmem:[%s2 + $0x568] sm:$0xff]
      %v525 = vld [vmem:[%s2 + $0x570] sm:$0xff]
      %v526 = vld [vmem:[%s2 + $0x578] sm:$0xff]
      %v527 = vld [vmem:[%s2 + $0x580] sm:$0xff]
      %v528 = vld [vmem:[%s2 + $0x588] sm:$0xff]
      %v529 = vld [vmem:[%s2 + $0x590] sm:$0xff]
      %v530 = vld [vmem:[%s2 + $0x598] sm:$0xff]
      %v531 = vld [vmem:[%s2 + $0x5a0] sm:$0xff]
      %v532 = vld [vmem:[%s2 + $0x5a8] sm:$0xff]
      %v533 = vld [vmem:[%s2 + $0x5b0] sm:$0xff]
      %v534 = vld [vmem:[%s2 + $0x5b8] sm:$0xff]
      %v535 = vld [vmem:[%s2 + $0x5c0] sm:$0xff]
      %v536 = vld [vmem:[%s2 + $0x5c8] sm:$0xff]
      %v537 = vld [vmem:[%s2 + $0x5d0] sm:$0xff]
      %v538 = vld [vmem:[%s2 + $0x5d8] sm:$0xff]
      %v539 = vld [vmem:[%s2 + $0x5e0] sm:$0xff]
      %v540 = vld [vmem:[%s2 + $0x5e8] sm:$0xff]
      %v541 = vld [vmem:[%s2 + $0x5f0] sm:$0xff]
      %v542 = vld [vmem:[%s2 + $0x5f8] sm:$0xff]
      %v543 = vld [vmem:[%s2 + $0x600] sm:$0xff]
      %v544 = vld [vmem:[%s2 + $0x608] sm:$0xff]
      %v545 = vld [vmem:[%s2 + $0x610] sm:$0xff]
      %v546 = vld [vmem:[%s2 + $0x618] sm:$0xff]
      %v547 = vld [vmem:[%s2 + $0x620] sm:$0xff]
      %v548 = vld [vmem:[%s2 + $0x628] sm:$0xff]
      %v549 = vld [vmem:[%s2 + $0x630] sm:$0xff]
      %v550 = vld [vmem:[%s2 + $0x638] sm:$0xff]
      %v551 = vld [vmem:[%s2 + $0x640] sm:$0xff]
      %v552 = vld [vmem:[%s2 + $0x648] sm:$0xff]
      %v553 = vld [vmem:[%s2 + $0x650] sm:$0xff]
      %v554 = vld [vmem:[%s2 + $0x658] sm:$0xff]
      %v555 = vld [vmem:[%s2 + $0x660] sm:$0xff]
      %v556 = vld [vmem:[%s2 + $0x668] sm:$0xff]
      %v557 = vld [vmem:[%s2 + $0x670] sm:$0xff]
      %v558 = vld [vmem:[%s2 + $0x678] sm:$0xff]
      %v559 = vld [vmem:[%s2 + $0x680] sm:$0xff]
      %v560 = vld [vmem:[%s2 + $0x688] sm:$0xff]
      %v561 = vld [vmem:[%s2 + $0x690] sm:$0xff]
      %v562 = vld [vmem:[%s2 + $0x698] sm:$0xff]
      %v563 = vld [vmem:[%s2 + $0x6a0] sm:$0xff]
      %v564 = vld [vmem:[%s2 + $0x6a8] sm:$0xff]
      %v565 = vld [vmem:[%s2 + $0x6b0] sm:$0xff]
      %v566 = vld [vmem:[%s2 + $0x6b8] sm:$0xff]
      %v567 = vld [vmem:[%s2 + $0x6c0] sm:$0xff]
      %v568 = vld [vmem:[%s2 + $0x6c8] sm:$0xff]
      %v569 = vld [vmem:[%s2 + $0x6d0] sm:$0xff]
      %v570 = vld [vmem:[%s2 + $0x6d8] sm:$0xff]
      %v571 = vld [vmem:[%s2 + $0x6e0] sm:$0xff]
      %v572 = vld [vmem:[%s2 + $0x6e8] sm:$0xff]
      %v573 = vld [vmem:[%s2 + $0x6f0] sm:$0xff]
      %v574 = vld [vmem:[%s2 + $0x6f8] sm:$0xff]
      %v575 = vld [vmem:[%s2 + $0x700] sm:$0xff]
      %v576 = vld [vmem:[%s2 + $0x708] sm:$0xff]
      %v577 = vld [vmem:[%s2 + $0x710] sm:$0xff]
      %v578 = vld [vmem:[%s2 + $0x718] sm:$0xff]
      %v579 = vld [vmem:[%s2 + $0x720] sm:$0xff]
      %v580 = vld [vmem:[%s2 + $0x728] sm:$0xff]
      %v581 = vld [vmem:[%s2 + $0x730] sm:$0xff]
      %v582 = vld [vmem:[%s2 + $0x738] sm:$0xff]
      %v583 = vld [vmem:[%s2 + $0x740] sm:$0xff]
      %v584 = vld [vmem:[%s2 + $0x748] sm:$0xff]
      %v585 = vld [vmem:[%s2 + $0x750] sm:$0xff]
      %v586 = vld [vmem:[%s2 + $0x758] sm:$0xff]
      %v587 = vld [vmem:[%s2 + $0x760] sm:$0xff]
      %v588 = vld [vmem:[%s2 + $0x768] sm:$0xff]
      %v589 = vld [vmem:[%s2 + $0x770] sm:$0xff]
      %v590 = vld [vmem:[%s2 + $0x778] sm:$0xff]
      %v591 = vld [vmem:[%s2 + $0x780] sm:$0xff]
      %v592 = vld [vmem:[%s2 + $0x788] sm:$0xff]
      %v593 = vld [vmem:[%s2 + $0x790] sm:$0xff]
      %v594 = vld [vmem:[%s2 + $0x798] sm:$0xff]
      %v595 = vld [vmem:[%s2 + $0x7a0] sm:$0xff]
      %v596 = vld [vmem:[%s2 + $0x7a8] sm:$0xff]
      %v597 = vld [vmem:[%s2 + $0x7b0] sm:$0xff]
      %v598 = vld [vmem:[%s2 + $0x7b8] sm:$0xff]
      %v599 = vld [vmem:[%s2 + $0x7c0] sm:$0xff]
      %v600 = vld [vmem:[%s2 + $0x7c8] sm:$0xff]
      %v601 = vld [vmem:[%s2 + $0x7d0] sm:$0xff]
      %v602 = vld [vmem:[%s2 + $0x7d8] sm:$0xff]
      %v603 = vld [vmem:[%s2 + $0x7e0] sm:$0xff]
      %v604 = vld [vmem:[%s2 + $0x7e8] sm:$0xff]
      %v605 = vld [vmem:[%s2 + $0x7f0] sm:$0xff]
      %v606 = vld [vmem:[%s2 + $0x7f8] sm:$0xff]
      %607 = vmatprep.subr.mxu0 %v412
      %608 = vmatpush1.msra.mxu0 %v411
      %609 = vmatprep.subr.mxu0 %v408
      %610 = vmatpush1.msra.mxu0 %v407
      %611 = vmatprep.subr.mxu0 %v404
      %612 = vmatpush1.msra.mxu0 %v403
      %613 = vmatprep.subr.mxu0 %v400
      %614 = vmatpush1.msra.mxu0 %v399
      %615 = vmatprep.subr.mxu0 %v396
      %616 = vmatpush1.msra.mxu0 %v395
      %617 = vmatprep.subr.mxu0 %v392
      %618 = vmatpush1.msra.mxu0 %v391
      %619 = vmatprep.subr.mxu0 %v388
      %620 = vmatpush1.msra.mxu0 %v387
      %621 = vmatprep.subr.mxu0 %v384
      %622 = vmatpush1.msra.mxu0 %v383
      %623 = vmatprep.subr.mxu0 %v380
      %624 = vmatpush1.msra.mxu0 %v379
      %625 = vmatprep.subr.mxu0 %v376
      %626 = vmatpush1.msra.mxu0 %v375
      %627 = vmatprep.subr.mxu0 %v372
      %628 = vmatpush1.msra.mxu0 %v371
      %629 = vmatprep.subr.mxu0 %v368
      %630 = vmatpush1.msra.mxu0 %v367
      %631 = vmatprep.subr.mxu0 %v364
      %632 = vmatpush1.msra.mxu0 %v363
      %633 = vmatprep.subr.mxu0 %v360
      %634 = vmatpush1.msra.mxu0 %v359
      %635 = vmatprep.subr.mxu0 %v356
      %636 = vmatpush1.msra.mxu0 %v355
      %637 = vmatprep.subr.mxu0 %v352
      %638 = vmatpush1.msra.mxu0 %v351
      %639 = vmatprep.subr.mxu0 %v476
      %640 = vmatpush2.msra.mxu0 %v475
      %641 = vmatprep.subr.mxu0 %v472
      %642 = vmatpush2.msra.mxu0 %v471
      %643 = vmatprep.subr.mxu0 %v468
      %644 = vmatpush2.msra.mxu0 %v467
      %645 = vmatprep.subr.mxu0 %v464
      %646 = vmatpush2.msra.mxu0 %v463
      %647 = vmatprep.subr.mxu0 %v460
      %648 = vmatpush2.msra.mxu0 %v459
      %649 = vmatprep.subr.mxu0 %v456
      %650 = vmatpush2.msra.mxu0 %v455
      %651 = vmatprep.subr.mxu0 %v452
      %652 = vmatpush2.msra.mxu0 %v451
      %653 = vmatprep.subr.mxu0 %v448
      %654 = vmatpush2.msra.mxu0 %v447
      %655 = vmatprep.subr.mxu0 %v444
      %656 = vmatpush2.msra.mxu0 %v443
      %657 = vmatprep.subr.mxu0 %v440
      %658 = vmatpush2.msra.mxu0 %v439
      %659 = vmatprep.subr.mxu0 %v436
      %660 = vmatpush2.msra.mxu0 %v435
      %661 = vmatprep.subr.mxu0 %v432
      %662 = vmatpush2.msra.mxu0 %v431
      %663 = vmatprep.subr.mxu0 %v428
      %664 = vmatpush2.msra.mxu0 %v427
      %665 = vmatprep.subr.mxu0 %v424
      %666 = vmatpush2.msra.mxu0 %v423
      %667 = vmatprep.subr.mxu0 %v420
      %668 = vmatpush2.msra.mxu0 %v419
      %669 = vmatprep.subr.mxu0 %v416
      %670 = vmatpush2.msra.mxu0 %v415
      %671 = vmatprep.mubr.f32.mxu0 %v284
      %672 = vmatmul.mubr.f32.gmra.mxu0 %v283
      %v673 = vpop.f32.mrf.mxu0
      %v674 = vadd.f32 0.0, %v673
      %v675 = vpop.f32.mrf.mxu0
      %v676 = vadd.f32 0.0, %v675
      %677 = vmatprep.mubr.f32.mxu0 %v288
      %678 = vmatmul.mubr.f32.gmra.mxu0 %v287
      %v679 = vpop.f32.mrf.mxu0
      %v680 = vadd.f32 0.0, %v679
      %v681 = vpop.f32.mrf.mxu0
      %v682 = vadd.f32 0.0, %v681
      %683 = vmatprep.mubr.f32.mxu0 %v292
      %684 = vmatmul.mubr.f32.gmra.mxu0 %v291
      %v685 = vpop.f32.mrf.mxu0
      %v686 = vadd.f32 0.0, %v685
      %v687 = vpop.f32.mrf.mxu0
      %v688 = vadd.f32 0.0, %v687
      %689 = vmatprep.mubr.f32.mxu0 %v296
      %690 = vmatmul.mubr.f32.gmra.mxu0 %v295
      %v691 = vpop.f32.mrf.mxu0
      %v692 = vadd.f32 0.0, %v691
      %v693 = vpop.f32.mrf.mxu0
      %v694 = vadd.f32 0.0, %v693
      %695 = vmatprep.mubr.f32.mxu0 %v300
      %696 = vmatmul.mubr.f32.gmra.mxu0 %v299
      %v697 = vpop.f32.mrf.mxu0
      %v698 = vadd.f32 0.0, %v697
      %v699 = vpop.f32.mrf.mxu0
      %v700 = vadd.f32 0.0, %v699
      %701 = vmatprep.mubr.f32.mxu0 %v304
      %702 = vmatmul.mubr.f32.gmra.mxu0 %v303
      %v703 = vpop.f32.mrf.mxu0
      %v704 = vadd.f32 0.0, %v703
      %v705 = vpop.f32.mrf.mxu0
      %v706 = vadd.f32 0.0, %v705
      %707 = vmatprep.mubr.f32.mxu0 %v308
      %708 = vmatmul.mubr.f32.gmra.mxu0 %v307
      %v709 = vpop.f32.mrf.mxu0
      %v710 = vadd.f32 0.0, %v709
      %v711 = vpop.f32.mrf.mxu0
      %v712 = vadd.f32 0.0, %v711
      %713 = vmatprep.mubr.f32.mxu0 %v312
      %714 = vmatmul.mubr.f32.gmra.mxu0 %v311
      %v715 = vpop.f32.mrf.mxu0
      %v716 = vadd.f32 0.0, %v715
      %v717 = vpop.f32.mrf.mxu0
      %v718 = vadd.f32 0.0, %v717
      %719 = vmatprep.mubr.f32.mxu0 %v316
      %720 = vmatmul.mubr.f32.gmra.mxu0 %v315
      %v721 = vpop.f32.mrf.mxu0
      %v722 = vadd.f32 0.0, %v721
      %v723 = vpop.f32.mrf.mxu0
      %v724 = vadd.f32 0.0, %v723
      %725 = vmatprep.mubr.f32.mxu0 %v320
      %726 = vmatmul.mubr.f32.gmra.mxu0 %v319
      %v727 = vpop.f32.mrf.mxu0
      %v728 = vadd.f32 0.0, %v727
      %v729 = vpop.f32.mrf.mxu0
      %v730 = vadd.f32 0.0, %v729
      %731 = vmatprep.mubr.f32.mxu0 %v324
      %732 = vmatmul.mubr.f32.gmra.mxu0 %v323
      %v733 = vpop.f32.mrf.mxu0
      %v734 = vadd.f32 0.0, %v733
      %v735 = vpop.f32.mrf.mxu0
      %v736 = vadd.f32 0.0, %v735
      %737 = vmatprep.mubr.f32.mxu0 %v328
      %738 = vmatmul.mubr.f32.gmra.mxu0 %v327
      %v739 = vpop.f32.mrf.mxu0
      %v740 = vadd.f32 0.0, %v739
      %v741 = vpop.f32.mrf.mxu0
      %v742 = vadd.f32 0.0, %v741
      %743 = vmatprep.mubr.f32.mxu0 %v332
      %744 = vmatmul.mubr.f32.gmra.mxu0 %v331
      %v745 = vpop.f32.mrf.mxu0
      %v746 = vadd.f32 0.0, %v745
      %v747 = vpop.f32.mrf.mxu0
      %v748 = vadd.f32 0.0, %v747
      %749 = vmatprep.mubr.f32.mxu0 %v336
      %750 = vmatmul.mubr.f32.gmra.mxu0 %v335
      %v751 = vpop.f32.mrf.mxu0
      %v752 = vadd.f32 0.0, %v751
      %v753 = vpop.f32.mrf.mxu0
      %v754 = vadd.f32 0.0, %v753
      %755 = vmatprep.mubr.f32.mxu0 %v340
      %756 = vmatmul.mubr.f32.gmra.mxu0 %v339
      %v757 = vpop.f32.mrf.mxu0
      %v758 = vadd.f32 0.0, %v757
      %v759 = vpop.f32.mrf.mxu0
      %v760 = vadd.f32 0.0, %v759
      %761 = vmatprep.mubr.f32.mxu0 %v344
      %762 = vmatmul.mubr.f32.gmra.mxu0 %v343
      %v763 = vpop.f32.mrf.mxu0
      %v764 = vadd.f32 0.0, %v763
      %v765 = vpop.f32.mrf.mxu0
      %v766 = vadd.f32 0.0, %v765
      %767 = vmatprep.mubr.f32.mxu0 %v348
      %768 = vmatmul.mubr.f32.gmra.mxu0 %v347
      %v769 = vpop.f32.mrf.mxu0
      %v770 = vpop.f32.mrf.mxu0
      %v771 = vadd.f32 0.0, %v770
      %772 = vdwg.mxu0
      %773 = vmatprep.subr.mxu0 %v540
      %774 = vmatpush1.msra.mxu0 %v539
      %775 = vmatprep.subr.mxu0 %v536
      %776 = vmatpush1.msra.mxu0 %v535
      %777 = vmatprep.subr.mxu0 %v532
      %778 = vmatpush1.msra.mxu0 %v531
      %779 = vmatprep.subr.mxu0 %v528
      %780 = vmatpush1.msra.mxu0 %v527
      %781 = vmatprep.subr.mxu0 %v524
      %782 = vmatpush1.msra.mxu0 %v523
      %783 = vmatprep.subr.mxu0 %v520
      %784 = vmatpush1.msra.mxu0 %v519
      %785 = vmatprep.subr.mxu0 %v516
      %786 = vmatpush1.msra.mxu0 %v515
      %787 = vmatprep.subr.mxu0 %v512
      %788 = vmatpush1.msra.mxu0 %v511
      %789 = vmatprep.subr.mxu0 %v508
      %790 = vmatpush1.msra.mxu0 %v507
      %791 = vmatprep.subr.mxu0 %v504
      %792 = vmatpush1.msra.mxu0 %v503
      %793 = vmatprep.subr.mxu0 %v500
      %794 = vmatpush1.msra.mxu0 %v499
      %795 = vmatprep.subr.mxu0 %v496
      %796 = vmatpush1.msra.mxu0 %v495
      %797 = vmatprep.subr.mxu0 %v492
      %798 = vmatpush1.msra.mxu0 %v491
      %799 = vmatprep.subr.mxu0 %v488
      %800 = vmatpush1.msra.mxu0 %v487
      %801 = vmatprep.subr.mxu0 %v484
      %802 = vmatpush1.msra.mxu0 %v483
      %803 = vmatprep.subr.mxu0 %v480
      %804 = vmatpush1.msra.mxu0 %v479
      %805 = vmatprep.subr.mxu0 %v604
      %806 = vmatpush2.msra.mxu0 %v603
      %807 = vmatprep.subr.mxu0 %v600
      %808 = vmatpush2.msra.mxu0 %v599
      %809 = vmatprep.subr.mxu0 %v596
      %810 = vmatpush2.msra.mxu0 %v595
      %811 = vmatprep.subr.mxu0 %v592
      %812 = vmatpush2.msra.mxu0 %v591
      %813 = vmatprep.subr.mxu0 %v588
      %814 = vmatpush2.msra.mxu0 %v587
      %815 = vmatprep.subr.mxu0 %v584
      %816 = vmatpush2.msra.mxu0 %v583
      %817 = vmatprep.subr.mxu0 %v580
      %818 = vmatpush2.msra.mxu0 %v579
      %819 = vmatprep.subr.mxu0 %v576
      %820 = vmatpush2.msra.mxu0 %v575
      %821 = vmatprep.subr.mxu0 %v572
      %822 = vmatpush2.msra.mxu0 %v571
      %823 = vmatprep.subr.mxu0 %v568
      %824 = vmatpush2.msra.mxu0 %v567
      %825 = vmatprep.subr.mxu0 %v564
      %826 = vmatpush2.msra.mxu0 %v563
      %827 = vmatprep.subr.mxu0 %v560
      %828 = vmatpush2.msra.mxu0 %v559
      %829 = vmatprep.subr.mxu0 %v556
      %830 = vmatpush2.msra.mxu0 %v555
      %831 = vmatprep.subr.mxu0 %v552
      %832 = vmatpush2.msra.mxu0 %v551
      %833 = vmatprep.subr.mxu0 %v548
      %834 = vmatpush2.msra.mxu0 %v547
      %835 = vmatprep.subr.mxu0 %v544
      %836 = vmatpush2.msra.mxu0 %v543
      %837 = vmatprep.mubr.f32.mxu0 %v286
      %838 = vmatmul.mubr.f32.gmra.mxu0 %v285
      %v839 = vpop.f32.mrf.mxu0
      %v840 = vadd.f32 %v674, %v839
      %v841 = vpop.f32.mrf.mxu0
      %v842 = vadd.f32 %v676, %v841
      %843 = vmatprep.mubr.f32.mxu0 %v290
      %844 = vmatmul.mubr.f32.gmra.mxu0 %v289
      %v845 = vpop.f32.mrf.mxu0
      %v846 = vadd.f32 %v680, %v845
      %v847 = vpop.f32.mrf.mxu0
      %v848 = vadd.f32 %v682, %v847
      %849 = vmatprep.mubr.f32.mxu0 %v294
      %850 = vmatmul.mubr.f32.gmra.mxu0 %v293
      %v851 = vpop.f32.mrf.mxu0
      %v852 = vadd.f32 %v686, %v851
      %v853 = vpop.f32.mrf.mxu0
      %v854 = vadd.f32 %v688, %v853
      %855 = vmatprep.mubr.f32.mxu0 %v298
      %856 = vmatmul.mubr.f32.gmra.mxu0 %v297
      %v857 = vpop.f32.mrf.mxu0
      %v858 = vadd.f32 %v692, %v857
      %v859 = vpop.f32.mrf.mxu0
      %v860 = vadd.f32 %v694, %v859
      %861 = vmatprep.mubr.f32.mxu0 %v302
      %862 = vmatmul.mubr.f32.gmra.mxu0 %v301
      %v863 = vpop.f32.mrf.mxu0
      %v864 = vadd.f32 %v698, %v863
      %v865 = vpop.f32.mrf.mxu0
      %v866 = vadd.f32 %v700, %v865
      %867 = vmatprep.mubr.f32.mxu0 %v306
      %868 = vmatmul.mubr.f32.gmra.mxu0 %v305
      %v869 = vpop.f32.mrf.mxu0
      %v870 = vadd.f32 %v704, %v869
      %v871 = vpop.f32.mrf.mxu0
      %v872 = vadd.f32 %v706, %v871
      %873 = vmatprep.mubr.f32.mxu0 %v310
      %874 = vmatmul.mubr.f32.gmra.mxu0 %v309
      %v875 = vpop.f32.mrf.mxu0
      %v876 = vadd.f32 %v710, %v875
      %v877 = vpop.f32.mrf.mxu0
      %v878 = vadd.f32 %v712, %v877
      %879 = vmatprep.mubr.f32.mxu0 %v314
      %880 = vmatmul.mubr.f32.gmra.mxu0 %v313
      %v881 = vpop.f32.mrf.mxu0
      %v882 = vadd.f32 %v716, %v881
      %v883 = vpop.f32.mrf.mxu0
      %v884 = vadd.f32 %v718, %v883
      %885 = vmatprep.mubr.f32.mxu0 %v318
      %886 = vmatmul.mubr.f32.gmra.mxu0 %v317
      %v887 = vpop.f32.mrf.mxu0
      %v888 = vadd.f32 %v722, %v887
      %v889 = vpop.f32.mrf.mxu0
      %v890 = vadd.f32 %v724, %v889
      %891 = vmatprep.mubr.f32.mxu0 %v322
      %892 = vmatmul.mubr.f32.gmra.mxu0 %v321
      %v893 = vpop.f32.mrf.mxu0
      %v894 = vadd.f32 %v728, %v893
      %v895 = vpop.f32.mrf.mxu0
      %v896 = vadd.f32 %v730, %v895
      %897 = vmatprep.mubr.f32.mxu0 %v326
      %898 = vmatmul.mubr.f32.gmra.mxu0 %v325
      %v899 = vpop.f32.mrf.mxu0
      %v900 = vadd.f32 %v734, %v899
      %v901 = vpop.f32.mrf.mxu0
      %v902 = vadd.f32 %v736, %v901
      %903 = vmatprep.mubr.f32.mxu0 %v330
      %904 = vmatmul.mubr.f32.gmra.mxu0 %v329
      %v905 = vpop.f32.mrf.mxu0
      %v906 = vadd.f32 %v740, %v905
      %v907 = vpop.f32.mrf.mxu0
      %v908 = vadd.f32 %v742, %v907
      %909 = vmatprep.mubr.f32.mxu0 %v334
      %910 = vmatmul.mubr.f32.gmra.mxu0 %v333
      %v911 = vpop.f32.mrf.mxu0
      %v912 = vadd.f32 %v746, %v911
      %v913 = vpop.f32.mrf.mxu0
      %v914 = vadd.f32 %v748, %v913
      %915 = vmatprep.mubr.f32.mxu0 %v338
      %916 = vmatmul.mubr.f32.gmra.mxu0 %v337
      %v917 = vpop.f32.mrf.mxu0
      %v918 = vadd.f32 %v752, %v917
      %v919 = vpop.f32.mrf.mxu0
      %v920 = vadd.f32 %v754, %v919
      %921 = vmatprep.mubr.f32.mxu0 %v342
      %922 = vmatmul.mubr.f32.gmra.mxu0 %v341
      %v923 = vpop.f32.mrf.mxu0
      %v924 = vadd.f32 %v758, %v923
      %v925 = vpop.f32.mrf.mxu0
      %v926 = vadd.f32 %v760, %v925
      %927 = vmatprep.mubr.f32.mxu0 %v346
      %928 = vmatmul.mubr.f32.gmra.mxu0 %v345
      %v929 = vpop.f32.mrf.mxu0
      %v930 = vadd.f32 %v764, %v929
      %v931 = vpop.f32.mrf.mxu0
      %v932 = vadd.f32 %v766, %v931
      %933 = vmatprep.mubr.f32.mxu0 %v350
      %934 = vmatmul.mubr.f32.gmra.mxu0 %v349
      %v935 = vpop.f32.mrf.mxu0
      %v936 = vpop.f32.mrf.mxu0
      %v937 = vadd.f32 %v771, %v936
      %938 = vdwg.mxu0
      %939 = vmatprep.subr.mxu0 %v414
      %940 = vmatpush1.msra.mxu0 %v413
      %941 = vmatprep.subr.mxu0 %v410
      %942 = vmatpush1.msra.mxu0 %v409
      %943 = vmatprep.subr.mxu0 %v406
      %944 = vmatpush1.msra.mxu0 %v405
      %945 = vmatprep.subr.mxu0 %v402
      %946 = vmatpush1.msra.mxu0 %v401
      %947 = vmatprep.subr.mxu0 %v398
      %948 = vmatpush1.msra.mxu0 %v397
      %949 = vmatprep.subr.mxu0 %v394
      %950 = vmatpush1.msra.mxu0 %v393
      %951 = vmatprep.subr.mxu0 %v390
      %952 = vmatpush1.msra.mxu0 %v389
      %953 = vmatprep.subr.mxu0 %v386
      %954 = vmatpush1.msra.mxu0 %v385
      %955 = vmatprep.subr.mxu0 %v382
      %956 = vmatpush1.msra.mxu0 %v381
      %957 = vmatprep.subr.mxu0 %v378
      %958 = vmatpush1.msra.mxu0 %v377
      %959 = vmatprep.subr.mxu0 %v374
      %960 = vmatpush1.msra.mxu0 %v373
      %961 = vmatprep.subr.mxu0 %v370
      %962 = vmatpush1.msra.mxu0 %v369
      %963 = vmatprep.subr.mxu0 %v366
      %964 = vmatpush1.msra.mxu0 %v365
      %965 = vmatprep.subr.mxu0 %v362
      %966 = vmatpush1.msra.mxu0 %v361
      %967 = vmatprep.subr.mxu0 %v358
      %968 = vmatpush1.msra.mxu0 %v357
      %969 = vmatprep.subr.mxu0 %v354
      %970 = vmatpush1.msra.mxu0 %v353
      %971 = vmatprep.subr.mxu0 %v478
      %972 = vmatpush2.msra.mxu0 %v477
      %973 = vmatprep.subr.mxu0 %v474
      %974 = vmatpush2.msra.mxu0 %v473
      %975 = vmatprep.subr.mxu0 %v470
      %976 = vmatpush2.msra.mxu0 %v469
      %977 = vmatprep.subr.mxu0 %v466
      %978 = vmatpush2.msra.mxu0 %v465
      %979 = vmatprep.subr.mxu0 %v462
      %980 = vmatpush2.msra.mxu0 %v461
      %981 = vmatprep.subr.mxu0 %v458
      %982 = vmatpush2.msra.mxu0 %v457
      %983 = vmatprep.subr.mxu0 %v454
      %984 = vmatpush2.msra.mxu0 %v453
      %985 = vmatprep.subr.mxu0 %v450
      %986 = vmatpush2.msra.mxu0 %v449
      %987 = vmatprep.subr.mxu0 %v446
      %988 = vmatpush2.msra.mxu0 %v445
      %989 = vmatprep.subr.mxu0 %v442
      %990 = vmatpush2.msra.mxu0 %v441
      %991 = vmatprep.subr.mxu0 %v438
      %992 = vmatpush2.msra.mxu0 %v437
      %993 = vmatprep.subr.mxu0 %v434
      %994 = vmatpush2.msra.mxu0 %v433
      %995 = vmatprep.subr.mxu0 %v430
      %996 = vmatpush2.msra.mxu0 %v429
      %997 = vmatprep.subr.mxu0 %v426
      %998 = vmatpush2.msra.mxu0 %v425
      %999 = vmatprep.subr.mxu0 %v422
      %1000 = vmatpush2.msra.mxu0 %v421
      %1001 = vmatprep.subr.mxu0 %v418
      %1002 = vmatpush2.msra.mxu0 %v417
      %1003 = vmatprep.mubr.f32.mxu0 %v284
      %1004 = vmatmul.mubr.f32.gmra.mxu0 %v283
      %v1005 = vpop.f32.mrf.mxu0
      %v1006 = vadd.f32 0.0, %v1005
      %v1007 = vpop.f32.mrf.mxu0
      %v1008 = vadd.f32 0.0, %v1007
      %1009 = vmatprep.mubr.f32.mxu0 %v288
      %1010 = vmatmul.mubr.f32.gmra.mxu0 %v287
      %v1011 = vpop.f32.mrf.mxu0
      %v1012 = vadd.f32 0.0, %v1011
      %v1013 = vpop.f32.mrf.mxu0
      %v1014 = vadd.f32 0.0, %v1013
      %1015 = vmatprep.mubr.f32.mxu0 %v292
      %1016 = vmatmul.mubr.f32.gmra.mxu0 %v291
      %v1017 = vpop.f32.mrf.mxu0
      %v1018 = vadd.f32 0.0, %v1017
      %v1019 = vpop.f32.mrf.mxu0
      %v1020 = vadd.f32 0.0, %v1019
      %1021 = vmatprep.mubr.f32.mxu0 %v296
      %1022 = vmatmul.mubr.f32.gmra.mxu0 %v295
      %v1023 = vpop.f32.mrf.mxu0
      %v1024 = vadd.f32 0.0, %v1023
      %v1025 = vpop.f32.mrf.mxu0
      %v1026 = vadd.f32 0.0, %v1025
      %1027 = vmatprep.mubr.f32.mxu0 %v300
      %1028 = vmatmul.mubr.f32.gmra.mxu0 %v299
      %v1029 = vpop.f32.mrf.mxu0
      %v1030 = vadd.f32 0.0, %v1029
      %v1031 = vpop.f32.mrf.mxu0
      %v1032 = vadd.f32 0.0, %v1031
      %1033 = vmatprep.mubr.f32.mxu0 %v304
      %1034 = vmatmul.mubr.f32.gmra.mxu0 %v303
      %v1035 = vpop.f32.mrf.mxu0
      %v1036 = vadd.f32 0.0, %v1035
      %v1037 = vpop.f32.mrf.mxu0
      %v1038 = vadd.f32 0.0, %v1037
      %1039 = vmatprep.mubr.f32.mxu0 %v308
      %1040 = vmatmul.mubr.f32.gmra.mxu0 %v307
      %v1041 = vpop.f32.mrf.mxu0
      %v1042 = vadd.f32 0.0, %v1041
      %v1043 = vpop.f32.mrf.mxu0
      %v1044 = vadd.f32 0.0, %v1043
      %1045 = vmatprep.mubr.f32.mxu0 %v312
      %1046 = vmatmul.mubr.f32.gmra.mxu0 %v311
      %v1047 = vpop.f32.mrf.mxu0
      %v1048 = vadd.f32 0.0, %v1047
      %v1049 = vpop.f32.mrf.mxu0
      %v1050 = vadd.f32 0.0, %v1049
      %1051 = vmatprep.mubr.f32.mxu0 %v316
      %1052 = vmatmul.mubr.f32.gmra.mxu0 %v315
      %v1053 = vpop.f32.mrf.mxu0
      %v1054 = vadd.f32 0.0, %v1053
      %v1055 = vpop.f32.mrf.mxu0
      %v1056 = vadd.f32 0.0, %v1055
      %1057 = vmatprep.mubr.f32.mxu0 %v320
      %1058 = vmatmul.mubr.f32.gmra.mxu0 %v319
      %v1059 = vpop.f32.mrf.mxu0
      %v1060 = vadd.f32 0.0, %v1059
      %v1061 = vpop.f32.mrf.mxu0
      %v1062 = vadd.f32 0.0, %v1061
      %1063 = vmatprep.mubr.f32.mxu0 %v324
      %1064 = vmatmul.mubr.f32.gmra.mxu0 %v323
      %v1065 = vpop.f32.mrf.mxu0
      %v1066 = vadd.f32 0.0, %v1065
      %v1067 = vpop.f32.mrf.mxu0
      %v1068 = vadd.f32 0.0, %v1067
      %1069 = vmatprep.mubr.f32.mxu0 %v328
      %1070 = vmatmul.mubr.f32.gmra.mxu0 %v327
      %v1071 = vpop.f32.mrf.mxu0
      %v1072 = vadd.f32 0.0, %v1071
      %v1073 = vpop.f32.mrf.mxu0
      %v1074 = vadd.f32 0.0, %v1073
      %1075 = vmatprep.mubr.f32.mxu0 %v332
      %1076 = vmatmul.mubr.f32.gmra.mxu0 %v331
      %v1077 = vpop.f32.mrf.mxu0
      %v1078 = vadd.f32 0.0, %v1077
      %v1079 = vpop.f32.mrf.mxu0
      %v1080 = vadd.f32 0.0, %v1079
      %1081 = vmatprep.mubr.f32.mxu0 %v336
      %1082 = vmatmul.mubr.f32.gmra.mxu0 %v335
      %v1083 = vpop.f32.mrf.mxu0
      %v1084 = vadd.f32 0.0, %v1083
      %v1085 = vpop.f32.mrf.mxu0
      %v1086 = vadd.f32 0.0, %v1085
      %1087 = vmatprep.mubr.f32.mxu0 %v340
      %1088 = vmatmul.mubr.f32.gmra.mxu0 %v339
      %v1089 = vpop.f32.mrf.mxu0
      %v1090 = vadd.f32 0.0, %v1089
      %v1091 = vpop.f32.mrf.mxu0
      %v1092 = vadd.f32 0.0, %v1091
      %1093 = vmatprep.mubr.f32.mxu0 %v344
      %1094 = vmatmul.mubr.f32.gmra.mxu0 %v343
      %v1095 = vpop.f32.mrf.mxu0
      %v1096 = vadd.f32 0.0, %v1095
      %v1097 = vpop.f32.mrf.mxu0
      %v1098 = vadd.f32 0.0, %v1097
      %1099 = vmatprep.mubr.f32.mxu0 %v348
      %1100 = vmatmul.mubr.f32.gmra.mxu0 %v347
      %v1101 = vpop.f32.mrf.mxu0
      %v1102 = vadd.f32 0.0, %v1101
      %v1103 = vpop.f32.mrf.mxu0
      %v1104 = vadd.f32 0.0, %v1103
      %1105 = vdwg.mxu0
      %1106 = vmatprep.subr.mxu0 %v542
      %1107 = vmatpush1.msra.mxu0 %v541
      %1108 = vmatprep.subr.mxu0 %v538
      %1109 = vmatpush1.msra.mxu0 %v537
      %1110 = vmatprep.subr.mxu0 %v534
      %1111 = vmatpush1.msra.mxu0 %v533
      %1112 = vmatprep.subr.mxu0 %v530
      %1113 = vmatpush1.msra.mxu0 %v529
      %1114 = vmatprep.subr.mxu0 %v526
      %1115 = vmatpush1.msra.mxu0 %v525
      %1116 = vmatprep.subr.mxu0 %v522
      %1117 = vmatpush1.msra.mxu0 %v521
      %1118 = vmatprep.subr.mxu0 %v518
      %1119 = vmatpush1.msra.mxu0 %v517
      %1120 = vmatprep.subr.mxu0 %v514
      %1121 = vmatpush1.msra.mxu0 %v513
      %1122 = vmatprep.subr.mxu0 %v510
      %1123 = vmatpush1.msra.mxu0 %v509
      %1124 = vmatprep.subr.mxu0 %v506
      %1125 = vmatpush1.msra.mxu0 %v505
      %1126 = vmatprep.subr.mxu0 %v502
      %1127 = vmatpush1.msra.mxu0 %v501
      %1128 = vmatprep.subr.mxu0 %v498
      %1129 = vmatpush1.msra.mxu0 %v497
      %1130 = vmatprep.subr.mxu0 %v494
      %1131 = vmatpush1.msra.mxu0 %v493
      %1132 = vmatprep.subr.mxu0 %v490
      %1133 = vmatpush1.msra.mxu0 %v489
      %1134 = vmatprep.subr.mxu0 %v486
      %1135 = vmatpush1.msra.mxu0 %v485
      %1136 = vmatprep.subr.mxu0 %v482
      %1137 = vmatpush1.msra.mxu0 %v481
      %1138 = vmatprep.subr.mxu0 %v606
      %1139 = vmatpush2.msra.mxu0 %v605
      %1140 = vmatprep.subr.mxu0 %v602
      %1141 = vmatpush2.msra.mxu0 %v601
      %1142 = vmatprep.subr.mxu0 %v598
      %1143 = vmatpush2.msra.mxu0 %v597
      %1144 = vmatprep.subr.mxu0 %v594
      %1145 = vmatpush2.msra.mxu0 %v593
      %1146 = vmatprep.subr.mxu0 %v590
      %1147 = vmatpush2.msra.mxu0 %v589
      %1148 = vmatprep.subr.mxu0 %v586
      %1149 = vmatpush2.msra.mxu0 %v585
      %1150 = vmatprep.subr.mxu0 %v582
      %1151 = vmatpush2.msra.mxu0 %v581
      %1152 = vmatprep.subr.mxu0 %v578
      %1153 = vmatpush2.msra.mxu0 %v577
      %1154 = vmatprep.subr.mxu0 %v574
      %1155 = vmatpush2.msra.mxu0 %v573
      %1156 = vmatprep.subr.mxu0 %v570
      %1157 = vmatpush2.msra.mxu0 %v569
      %1158 = vmatprep.subr.mxu0 %v566
      %1159 = vmatpush2.msra.mxu0 %v565
      %1160 = vmatprep.subr.mxu0 %v562
      %1161 = vmatpush2.msra.mxu0 %v561
      %1162 = vmatprep.subr.mxu0 %v558
      %1163 = vmatpush2.msra.mxu0 %v557
      %1164 = vmatprep.subr.mxu0 %v554
      %1165 = vmatpush2.msra.mxu0 %v553
      %1166 = vmatprep.subr.mxu0 %v550
      %1167 = vmatpush2.msra.mxu0 %v549
      %1168 = vmatprep.subr.mxu0 %v546
      %1169 = vmatpush2.msra.mxu0 %v545
      %1170 = vmatprep.mubr.f32.mxu0 %v286
      %1171 = vmatmul.mubr.f32.gmra.mxu0 %v285
      %v1172 = vpop.f32.mrf.mxu0
      %v1173 = vadd.f32 %v1006, %v1172
      %v1174 = vpop.f32.mrf.mxu0
      %v1175 = vadd.f32 %v1008, %v1174
      %1176 = vmatprep.mubr.f32.mxu0 %v290
      %1177 = vmatmul.mubr.f32.gmra.mxu0 %v289
      %v1178 = vpop.f32.mrf.mxu0
      %v1179 = vadd.f32 %v1012, %v1178
      %v1180 = vpop.f32.mrf.mxu0
      %v1181 = vadd.f32 %v1014, %v1180
      %1182 = vmatprep.mubr.f32.mxu0 %v294
      %1183 = vmatmul.mubr.f32.gmra.mxu0 %v293
      %v1184 = vpop.f32.mrf.mxu0
      %v1185 = vadd.f32 %v1018, %v1184
      %v1186 = vpop.f32.mrf.mxu0
      %v1187 = vadd.f32 %v1020, %v1186
      %1188 = vmatprep.mubr.f32.mxu0 %v298
      %1189 = vmatmul.mubr.f32.gmra.mxu0 %v297
      %v1190 = vpop.f32.mrf.mxu0
      %v1191 = vadd.f32 %v1024, %v1190
      %v1192 = vpop.f32.mrf.mxu0
      %v1193 = vadd.f32 %v1026, %v1192
      %1194 = vmatprep.mubr.f32.mxu0 %v302
      %1195 = vmatmul.mubr.f32.gmra.mxu0 %v301
      %v1196 = vpop.f32.mrf.mxu0
      %v1197 = vadd.f32 %v1030, %v1196
      %v1198 = vpop.f32.mrf.mxu0
      %v1199 = vadd.f32 %v1032, %v1198
      %1200 = vmatprep.mubr.f32.mxu0 %v306
      %1201 = vmatmul.mubr.f32.gmra.mxu0 %v305
      %v1202 = vpop.f32.mrf.mxu0
      %v1203 = vadd.f32 %v1036, %v1202
      %v1204 = vpop.f32.mrf.mxu0
      %v1205 = vadd.f32 %v1038, %v1204
      %1206 = vmatprep.mubr.f32.mxu0 %v310
      %1207 = vmatmul.mubr.f32.gmra.mxu0 %v309
      %v1208 = vpop.f32.mrf.mxu0
      %v1209 = vadd.f32 %v1042, %v1208
      %v1210 = vpop.f32.mrf.mxu0
      %v1211 = vadd.f32 %v1044, %v1210
      %1212 = vmatprep.mubr.f32.mxu0 %v314
      %1213 = vmatmul.mubr.f32.gmra.mxu0 %v313
      %v1214 = vpop.f32.mrf.mxu0
      %v1215 = vadd.f32 %v1048, %v1214
      %v1216 = vpop.f32.mrf.mxu0
      %v1217 = vadd.f32 %v1050, %v1216
      %1218 = vmatprep.mubr.f32.mxu0 %v318
      %1219 = vmatmul.mubr.f32.gmra.mxu0 %v317
      %v1220 = vpop.f32.mrf.mxu0
      %v1221 = vadd.f32 %v1054, %v1220
      %v1222 = vpop.f32.mrf.mxu0
      %v1223 = vadd.f32 %v1056, %v1222
      %1224 = vmatprep.mubr.f32.mxu0 %v322
      %1225 = vmatmul.mubr.f32.gmra.mxu0 %v321
      %v1226 = vpop.f32.mrf.mxu0
      %v1227 = vadd.f32 %v1060, %v1226
      %v1228 = vpop.f32.mrf.mxu0
      %v1229 = vadd.f32 %v1062, %v1228
      %1230 = vmatprep.mubr.f32.mxu0 %v326
      %1231 = vmatmul.mubr.f32.gmra.mxu0 %v325
      %v1232 = vpop.f32.mrf.mxu0
      %v1233 = vadd.f32 %v1066, %v1232
      %v1234 = vpop.f32.mrf.mxu0
      %v1235 = vadd.f32 %v1068, %v1234
      %1236 = vmatprep.mubr.f32.mxu0 %v330
      %1237 = vmatmul.mubr.f32.gmra.mxu0 %v329
      %v1238 = vpop.f32.mrf.mxu0
      %v1239 = vadd.f32 %v1072, %v1238
      %v1240 = vpop.f32.mrf.mxu0
      %v1241 = vadd.f32 %v1074, %v1240
      %1242 = vmatprep.mubr.f32.mxu0 %v334
      %1243 = vmatmul.mubr.f32.gmra.mxu0 %v333
      %v1244 = vpop.f32.mrf.mxu0
      %v1245 = vadd.f32 %v1078, %v1244
      %v1246 = vpop.f32.mrf.mxu0
      %v1247 = vadd.f32 %v1080, %v1246
      %1248 = vmatprep.mubr.f32.mxu0 %v338
      %1249 = vmatmul.mubr.f32.gmra.mxu0 %v337
      %v1250 = vpop.f32.mrf.mxu0
      %v1251 = vadd.f32 %v1084, %v1250
      %v1252 = vpop.f32.mrf.mxu0
      %v1253 = vadd.f32 %v1086, %v1252
      %1254 = vmatprep.mubr.f32.mxu0 %v342
      %1255 = vmatmul.mubr.f32.gmra.mxu0 %v341
      %v1256 = vpop.f32.mrf.mxu0
      %v1257 = vadd.f32 %v1090, %v1256
      %v1258 = vpop.f32.mrf.mxu0
      %v1259 = vadd.f32 %v1092, %v1258
      %1260 = vmatprep.mubr.f32.mxu0 %v346
      %1261 = vmatmul.mubr.f32.gmra.mxu0 %v345
      %v1262 = vpop.f32.mrf.mxu0
      %v1263 = vadd.f32 %v1096, %v1262
      %v1264 = vpop.f32.mrf.mxu0
      %v1265 = vadd.f32 %v1098, %v1264
      %1266 = vmatprep.mubr.f32.mxu0 %v350
      %1267 = vmatmul.mubr.f32.gmra.mxu0 %v349
      %v1268 = vpop.f32.mrf.mxu0
      %v1269 = vadd.f32 %v1102, %v1268
      %v1270 = vpop.f32.mrf.mxu0
      %v1271 = vadd.f32 %v1104, %v1270
      %1272 = vdwg.mxu0
      %vm1290 = vcmask 1046528
      %v1291 = vrot.slane %v842, 1
      %v1292 = vrot.slane %v848, 1
      %v1293 = vsel %vm1290, %v1291, %v1292
      %v1294 = vrot.slane %v854, 1
      %v1295 = vsel %vm1290, %v1292, %v1294
      %v1296 = vrot.slane %v860, 1
      %v1297 = vsel %vm1290, %v1294, %v1296
      %v1298 = vrot.slane %v866, 1
      %v1299 = vsel %vm1290, %v1296, %v1298
      %v1300 = vrot.slane %v872, 1
      %v1301 = vsel %vm1290, %v1298, %v1300
      %v1302 = vrot.slane %v878, 1
      %v1303 = vsel %vm1290, %v1300, %v1302
      %v1304 = vrot.slane %v884, 1
      %v1305 = vsel %vm1290, %v1302, %v1304
      %v1306 = vrot.slane %v890, 1
      %v1307 = vsel %vm1290, %v1304, %v1306
      %v1308 = vrot.slane %v896, 1
      %v1309 = vsel %vm1290, %v1306, %v1308
      %v1310 = vrot.slane %v902, 1
      %v1311 = vsel %vm1290, %v1308, %v1310
      %v1312 = vrot.slane %v908, 1
      %v1313 = vsel %vm1290, %v1310, %v1312
      %v1314 = vrot.slane %v914, 1
      %v1315 = vsel %vm1290, %v1312, %v1314
      %v1316 = vrot.slane %v920, 1
      %v1317 = vsel %vm1290, %v1314, %v1316
      %v1318 = vrot.slane %v926, 1
      %v1319 = vsel %vm1290, %v1316, %v1318
      %v1320 = vrot.slane %v932, 1
      %v1321 = vsel %vm1290, %v1318, %v1320
      %v1322 = vrot.slane %v937, 1
      %v1323 = vsel %vm1290, %v1320, %v1322
      %v1340 = vadd.f32 %v840, %v1293
      %v1341 = vadd.f32 %v846, %v1295
      %v1342 = vadd.f32 %v852, %v1297
      %v1343 = vadd.f32 %v858, %v1299
      %v1344 = vadd.f32 %v864, %v1301
      %v1345 = vadd.f32 %v870, %v1303
      %v1346 = vadd.f32 %v876, %v1305
      %v1347 = vadd.f32 %v882, %v1307
      %v1348 = vadd.f32 %v888, %v1309
      %v1349 = vadd.f32 %v894, %v1311
      %v1350 = vadd.f32 %v900, %v1313
      %v1351 = vadd.f32 %v906, %v1315
      %v1352 = vadd.f32 %v912, %v1317
      %v1353 = vadd.f32 %v918, %v1319
      %v1354 = vadd.f32 %v924, %v1321
      %v1355 = vadd.f32 %v930, %v1323
      %vm1373 = vcmask 1045504
      %v1374 = vrot.slane %v1173, 2
      %v1375 = vrot.slane %v1179, 2
      %v1376 = vsel %vm1373, %v1374, %v1375
      %v1377 = vrot.slane %v1185, 2
      %v1378 = vsel %vm1373, %v1375, %v1377
      %v1379 = vrot.slane %v1191, 2
      %v1380 = vsel %vm1373, %v1377, %v1379
      %v1381 = vrot.slane %v1197, 2
      %v1382 = vsel %vm1373, %v1379, %v1381
      %v1383 = vrot.slane %v1203, 2
      %v1384 = vsel %vm1373, %v1381, %v1383
      %v1385 = vrot.slane %v1209, 2
      %v1386 = vsel %vm1373, %v1383, %v1385
      %v1387 = vrot.slane %v1215, 2
      %v1388 = vsel %vm1373, %v1385, %v1387
      %v1389 = vrot.slane %v1221, 2
      %v1390 = vsel %vm1373, %v1387, %v1389
      %v1391 = vrot.slane %v1227, 2
      %v1392 = vsel %vm1373, %v1389, %v1391
      %v1393 = vrot.slane %v1233, 2
      %v1394 = vsel %vm1373, %v1391, %v1393
      %v1395 = vrot.slane %v1239, 2
      %v1396 = vsel %vm1373, %v1393, %v1395
      %v1397 = vrot.slane %v1245, 2
      %v1398 = vsel %vm1373, %v1395, %v1397
      %v1399 = vrot.slane %v1251, 2
      %v1400 = vsel %vm1373, %v1397, %v1399
      %v1401 = vrot.slane %v1257, 2
      %v1402 = vsel %vm1373, %v1399, %v1401
      %v1403 = vrot.slane %v1263, 2
      %v1404 = vsel %vm1373, %v1401, %v1403
      %v1405 = vrot.slane %v1269, 2
      %v1406 = vsel %vm1373, %v1403, %v1405
      %v1423 = vadd.f32 %v1340, %v1376
      %v1424 = vadd.f32 %v1341, %v1378
      %v1425 = vadd.f32 %v1342, %v1380
      %v1426 = vadd.f32 %v1343, %v1382
      %v1427 = vadd.f32 %v1344, %v1384
      %v1428 = vadd.f32 %v1345, %v1386
      %v1429 = vadd.f32 %v1346, %v1388
      %v1430 = vadd.f32 %v1347, %v1390
      %v1431 = vadd.f32 %v1348, %v1392
      %v1432 = vadd.f32 %v1349, %v1394
      %v1433 = vadd.f32 %v1350, %v1396
      %v1434 = vadd.f32 %v1351, %v1398
      %v1435 = vadd.f32 %v1352, %v1400
      %v1436 = vadd.f32 %v1353, %v1402
      %v1437 = vadd.f32 %v1354, %v1404
      %v1438 = vadd.f32 %v1355, %v1406
      %vm1456 = vcmask 1044480
      %v1457 = vrot.slane %v1175, 3
      %v1458 = vrot.slane %v1181, 3
      %v1459 = vsel %vm1456, %v1457, %v1458
      %v1460 = vrot.slane %v1187, 3
      %v1461 = vsel %vm1456, %v1458, %v1460
      %v1462 = vrot.slane %v1193, 3
      %v1463 = vsel %vm1456, %v1460, %v1462
      %v1464 = vrot.slane %v1199, 3
      %v1465 = vsel %vm1456, %v1462, %v1464
      %v1466 = vrot.slane %v1205, 3
      %v1467 = vsel %vm1456, %v1464, %v1466
      %v1468 = vrot.slane %v1211, 3
      %v1469 = vsel %vm1456, %v1466, %v1468
      %v1470 = vrot.slane %v1217, 3
      %v1471 = vsel %vm1456, %v1468, %v1470
      %v1472 = vrot.slane %v1223, 3
      %v1473 = vsel %vm1456, %v1470, %v1472
      %v1474 = vrot.slane %v1229, 3
      %v1475 = vsel %vm1456, %v1472, %v1474
      %v1476 = vrot.slane %v1235, 3
      %v1477 = vsel %vm1456, %v1474, %v1476
      %v1478 = vrot.slane %v1241, 3
      %v1479 = vsel %vm1456, %v1476, %v1478
      %v1480 = vrot.slane %v1247, 3
      %v1481 = vsel %vm1456, %v1478, %v1480
      %v1482 = vrot.slane %v1253, 3
      %v1483 = vsel %vm1456, %v1480, %v1482
      %v1484 = vrot.slane %v1259, 3
      %v1485 = vsel %vm1456, %v1482, %v1484
      %v1486 = vrot.slane %v1265, 3
      %v1487 = vsel %vm1456, %v1484, %v1486
      %v1488 = vrot.slane %v1271, 3
      %v1489 = vsel %vm1456, %v1486, %v1488
      %v1506 = vadd.f32 %v1423, %v1459
      %v1507 = vadd.f32 %v1424, %v1461
      %v1508 = vadd.f32 %v1425, %v1463
      %v1509 = vadd.f32 %v1426, %v1465
      %v1510 = vadd.f32 %v1427, %v1467
      %v1511 = vadd.f32 %v1428, %v1469
      %v1512 = vadd.f32 %v1429, %v1471
      %v1513 = vadd.f32 %v1430, %v1473
      %v1514 = vadd.f32 %v1431, %v1475
      %v1515 = vadd.f32 %v1432, %v1477
      %v1516 = vadd.f32 %v1433, %v1479
      %v1517 = vadd.f32 %v1434, %v1481
      %v1518 = vadd.f32 %v1435, %v1483
      %v1519 = vadd.f32 %v1436, %v1485
      %v1520 = vadd.f32 %v1437, %v1487
      %v1521 = vadd.f32 %v1438, %v1489
      %v1522 = vand.u32 2147483647, %v1506
      %v1523 = vand.u32 2147483647, %v1507
      %v1524 = vand.u32 2147483647, %v1508
      %v1525 = vand.u32 2147483647, %v1509
      %v1526 = vand.u32 2147483647, %v1510
      %v1527 = vand.u32 2147483647, %v1511
      %v1528 = vand.u32 2147483647, %v1512
      %v1529 = vand.u32 2147483647, %v1513
      %v1530 = vand.u32 2147483647, %v1514
      %v1531 = vand.u32 2147483647, %v1515
      %v1532 = vand.u32 2147483647, %v1516
      %v1533 = vand.u32 2147483647, %v1517
      %v1534 = vand.u32 2147483647, %v1518
      %v1535 = vand.u32 2147483647, %v1519
      %v1536 = vand.u32 2147483647, %v1520
      %v1537 = vand.u32 2147483647, %v1521
      %1538 = vxpose.xlu0.b32.start [1/16] %v1522, 128
      %1539 = vxpose.xlu0.b32.cont [2/16] %v1523, 128
      %1540 = vxpose.xlu0.b32.cont [3/16] %v1524, 128
      %1541 = vxpose.xlu0.b32.cont [4/16] %v1525, 128
      %1542 = vxpose.xlu0.b32.cont [5/16] %v1526, 128
      %1543 = vxpose.xlu0.b32.cont [6/16] %v1527, 128
      %1544 = vxpose.xlu0.b32.cont [7/16] %v1528, 128
      %1545 = vxpose.xlu0.b32.cont [8/16] %v1529, 128
      %1546 = vxpose.xlu0.b32.cont [9/16] %v1530, 128
      %1547 = vxpose.xlu0.b32.cont [10/16] %v1531, 128
      %1548 = vxpose.xlu0.b32.cont [11/16] %v1532, 128
      %1549 = vxpose.xlu0.b32.cont [12/16] %v1533, 128
      %1550 = vxpose.xlu0.b32.cont [13/16] %v1534, 128
      %1551 = vxpose.xlu0.b32.cont [14/16] %v1535, 128
      %1552 = vxpose.xlu0.b32.cont [15/16] %v1536, 128
      %1553 = vxpose.xlu0.b32.end [16/16] %v1537, 128
      %v1554 = vpop.trf.xlu0
      %v1555 = vpop.trf.xlu0
      %v1556 = vpop.trf.xlu0
      %v1557 = vpop.trf.xlu0
      %v1558 = vpop.trf.xlu0
      %v1559 = vpop.trf.xlu0
      %v1560 = vpop.trf.xlu0
      %v1561 = vpop.trf.xlu0
      %v1562 = vpop.trf.xlu0
      %v1563 = vpop.trf.xlu0
      %v1564 = vpop.trf.xlu0
      %v1565 = vpop.trf.xlu0
      %v1566 = vpop.trf.xlu0
      %v1567 = vpop.trf.xlu0
      %v1568 = vpop.trf.xlu0
      %v1569 = vpop.trf.xlu0
      %1570 = vst [vmem:[%s282] sm:$0xff] %v1554
      %1571 = vst [vmem:[%s282 + $0x8] sm:$0xff] %v1555
      %1572 = vst [vmem:[%s282 + $0x10] sm:$0xff] %v1556
      %1573 = vst [vmem:[%s282 + $0x18] sm:$0xff] %v1557
      %1574 = vst [vmem:[%s282 + $0x20] sm:$0xff] %v1558
      %1575 = vst [vmem:[%s282 + $0x28] sm:$0xff] %v1559
      %1576 = vst [vmem:[%s282 + $0x30] sm:$0xff] %v1560
      %1577 = vst [vmem:[%s282 + $0x38] sm:$0xff] %v1561
      %1578 = vst [vmem:[%s282 + $0x40] sm:$0xff] %v1562
      %1579 = vst [vmem:[%s282 + $0x48] sm:$0xff] %v1563
      %1580 = vst [vmem:[%s282 + $0x50] sm:$0xff] %v1564
      %1581 = vst [vmem:[%s282 + $0x58] sm:$0xff] %v1565
      %1582 = vst [vmem:[%s282 + $0x60] sm:$0xff] %v1566
      %1583 = vst [vmem:[%s282 + $0x68] sm:$0xff] %v1567
      %1584 = vst [vmem:[%s282 + $0x70] sm:$0xff] %v1568
      %1585 = vst [vmem:[%s282 + $0x78] sm:$0xff] %v1569
      %p1586 = scmp.lt.s32.totalorder %s18, 1
      %s1587 = scalar_select %p1586, %s18, 1
      %p1588 = scmp.lt.s32.totalorder %s19, 0
      %s1589 = scalar_select %p1588, %s19, 0
      %s1590 = smul.addr %s1587, 16
      %s1591 = sadd.s32 %s1589, %s1590
      %s1592 = smul.addr %s1591, 8
      %s1593 = scalar_lea.vmem %s3, %s1592
      // Predicated region
      $region33: #{wavelet_conv.1} parent=31 // pred_check
        %p1594 = pneg %p127
      $region34: #{wavelet_conv.1} parent=31 // pred_check_branch
        %1596 = sbr.rel (%p1594) target = $region36
      $region35: #{wavelet_conv.1} parent=31 // pred_region
        _
      $region36: #{wavelet_conv.1} parent=31 // pred_fallthru
        _
    $region32: #{wavelet_conv.1} parent=5 // pred_fallthru
      _
    %p1597 = scmp.le.s32.totalorder 2, %s9
    // Predicated region
    $region37: #{wavelet_conv.1} parent=5 // pred_check
      %p1598 = pneg %p1597
    $region38: #{wavelet_conv.1} parent=5 // pred_check_branch
      %1600 = sbr.rel (%p1598) target = $region40
    $region39: #{wavelet_conv.1} parent=5 // pred_region
      %s1601 = ssub.s32 %s9, 2
      // Predicated region
      $region41: #{wavelet_conv.1} parent=39 // pred_check
        %p1602 = pneg %p133
      $region42: #{wavelet_conv.1} parent=39 // pred_check_branch
        %1604 = sbr.rel (%p1602) target = $region44
      $region43: #{wavelet_conv.1} parent=39 // pred_region
        %p1605 = scmp.lt.s32.totalorder %s20, 1
        %s1606 = scalar_select %p1605, %s20, 1
        %p1607 = scmp.lt.s32.totalorder %s21, 0
        %s1608 = scalar_select %p1607, %s21, 0
        %s1609 = smul.addr %s1606, 16
        %s1610 = sadd.s32 %s1608, %s1609
        %s1611 = smul.addr %s1610, 8
        %s1612 = scalar_lea.vmem %s3, %s1611
      $region44: #{wavelet_conv.1} parent=39 // pred_fallthru
        _
    $region40: #{wavelet_conv.1} parent=5 // pred_fallthru
      _
  $region6: #{wavelet_conv.1} parent=0 // loop_footer
    %s13 = sadd.s32 1, %s9
  $region7: #{wavelet_conv.1} parent=0 // loop_footer_branch
    %8 = sbr.rel target = $region3
  $region8: #{wavelet_conv.1} parent=0 // loop_exit
    _

</llo_original>
